<compile_context>
chip_gen: v7x
topology: tpu7x:2x2x1
jax: 0.10.0
libtpu: 0.0.40
codegen_flags: <defaults>
</compile_context>

<pallas_src>
import jax
import jax.numpy as jnp
from jax import lax
from jax.experimental import pallas as pl
from jax.experimental.pallas import tpu as pltpu


# ----------------------------- helpers --------------------------------------


def _round_up(x, m):
    return ((x + m - 1) // m) * m


def _cdiv(a, b):
    return -(-a // b)


def _pick_vmem_limit():
    """Scoped-VMEM limit per generation: ~3/4 of physical, capped at 96 MiB."""
    try:
        cap = int(pltpu.get_tpu_info().vmem_capacity_bytes)
    except Exception:
        cap = 64 * 1024 * 1024  # conservative default (v7x per-TensorCore)
    return min((3 * cap) // 4, 96 * 1024 * 1024)


def _choose_block_rows(batch, feat, itemsize, vmem_limit):
    """Rows per grid step: as big as the VMEM budget allows (bytes-capped only,
    multiple of 128 so the (1, tb) output row stays lane-dense)."""
    # Per-row VMEM cost: x row + (8, tb) f32 dot slab + (1, tb) f32 output row.
    bytes_per_row = feat * itemsize + 8 * 4 + 4
    weight_bytes = 2 * 8 * feat * 4  # double-buffered resident (8, D) f32 weight
    # ~16 MiB tiles on 128-MiB-VMEM parts (v5e/v6e), ~8 MiB on v7x.
    per_tile_cap = (16 << 20) if vmem_limit >= (64 << 20) else (8 << 20)
    usable = max(1 << 20, (vmem_limit - weight_bytes - (2 << 20)) // 2)
    budget = min(per_tile_cap, usable)
    tb = max(128, (budget // bytes_per_row) // 128 * 128)
    if tb >= batch:
        tb = _round_up(batch, 128)
        # Keep >=2 tiles for non-tiny batches so v7x's two TensorCores both
        # stream (batch grid axis is marked "parallel").
        if batch * feat * itemsize > (2 << 20) and batch >= 256:
            tb = _round_up(_cdiv(batch, 2), 128)
    return tb


def _xla_forward(x, w_row, b_vec):
    """Fused XLA fallback: tiny problems and very wide feature dims."""
    z = jnp.dot(x.astype(jnp.float32), w_row.T,
                precision=lax.Precision.HIGHEST) + b_vec
    return jax.nn.sigmoid(z)


# ----------------------------- kernel ---------------------------------------


def _make_logreg_kernel(tb, lane_chunk=2048):
    # Static lane-chunk boundaries (all multiples of 128) keep the (8, chunk)
    # f32 dot intermediate inside the vreg file instead of spilling for big tb.
    bounds = []
    s = 0
    while s < tb:
        c = min(lane_chunk, tb - s)
        bounds.append((s, c))
        s += c

    def kernel(x_ref, w_ref, b_ref, o_ref):
        # x_ref: (TB, D) activation tile (native dtype; upcast in-register)
        # w_ref: (8, D)  f32 weight, row 0 is the real weight, rows 1..7 zero
        # b_ref: (1,)    f32 bias scalar in SMEM
        # o_ref: (1, TB) lane-dense f32 output row
        w = w_ref[...]
        b = b_ref[0]
        for (s0, c0) in bounds:
            x = x_ref[pl.ds(s0, c0), :].astype(jnp.float32)
            # (8, D) @ (c0, D)^T -> (8, c0) on the MXU; only row 0 is real.
            z = lax.dot_general(
                w, x,
                dimension_numbers=(((1,), (1,)), ((), ())),
                preferred_element_type=jnp.float32,
            )
            z0 = z[0:1, :] + b
            # exp runs on the EUP; exact division keeps the 1e-5 contract.
            o_ref[:, pl.ds(s0, c0)] = (1.0 / (1.0 + jnp.exp(-z0))).astype(o_ref.dtype)

    return kernel


# ----------------------------- wrapper ---------------------------------------


def logistic_regression_forward(x, weight, bias, *, block_rows=None):
    """x: (B, D), weight: (1, D), bias: (1,) -> f32 (B, 1).

    Equivalent to torch.sigmoid(nn.Linear(D, 1)(x)). x may be f32 or bf16
    (bf16 halves HBM traffic); output is always f32.
    """
    B, D = x.shape
    itemsize = jnp.dtype(x.dtype).itemsize
    w_row = weight.reshape(1, D).astype(jnp.float32)
    b_vec = bias.reshape(1).astype(jnp.float32)
    vmem_limit = _pick_vmem_limit()

    if block_rows is None:
        data_bytes = B * D * itemsize
        min_tile_bytes = 2 * 128 * (D * itemsize + 36) + 2 * 8 * D * 4
        # Tiny problems: launch + per-step overhead dwarfs ~KiB of data.
        # Very wide D: a 128-row tile would not fit VMEM.
        # TODO(synk): add a K-tiled (feature-dim) Pallas path for very wide D.
        if data_bytes < (1 << 20) or min_tile_bytes > vmem_limit - (4 << 20):
            return _xla_forward(x, w_row, b_vec)
        tb = _choose_block_rows(B, D, itemsize, vmem_limit)
    else:
        assert block_rows % 128 == 0, "block_rows must be a multiple of 128"
        tb = block_rows

    num_tiles = _cdiv(B, tb)  # last block may be partial; no wrapper-side pad

    # Pad the weight to 8 rows (sublane multiple) so the MXU tile is well-formed.
    w8 = jnp.zeros((8, D), jnp.float32).at[0, :].set(w_row[0])

    out = pl.pallas_call(
        _make_logreg_kernel(tb),
        out_shape=jax.ShapeDtypeStruct((num_tiles, 1, tb), jnp.float32),
        grid_spec=pltpu.PrefetchScalarGridSpec(
            num_scalar_prefetch=0,
            grid=(num_tiles,),
            in_specs=[
                pl.BlockSpec((tb, D), lambda i: (i, 0)),             # stream x
                pl.BlockSpec((8, D), lambda i: (0, 0)),              # resident W
                pl.BlockSpec(memory_space=pltpu.MemorySpace.SMEM),   # bias scalar
            ],
            out_specs=pl.BlockSpec((None, 1, tb), lambda i: (i, 0, 0)),
        ),
        compiler_params=pltpu.CompilerParams(
            dimension_semantics=("parallel",),   # batch tiles are independent
            vmem_limit_bytes=vmem_limit,
        ),
        cost_estimate=pl.CostEstimate(
            flops=2 * B * D,
            transcendentals=B,
            bytes_accessed=B * D * itemsize + 8 * D * 4 + B * 4,
        ),
    )(x, w8, b_vec)

    # Garbage rows from the partial last block live only in [B:] and are
    # discarded here before any consumer can see them.
    return out.reshape(num_tiles * tb, 1)[:B]


# ----------------------------- demo / self-test ------------------------------


if __name__ == "__main__":
    key = jax.random.PRNGKey(0)
    k_x1, k_x2, k_x3, k_w, k_b = jax.random.split(key, 5)

    D = 128  # input_dim
    bound = 1.0 / float(jnp.sqrt(jnp.float32(D)))
    # Deterministic parameter init mimicking nn.Linear: U(-1/sqrt(D), 1/sqrt(D))
    weight = jax.random.uniform(k_w, (1, D), minval=-bound, maxval=bound,
                                dtype=jnp.float32)
    bias = jax.random.uniform(k_b, (1,), minval=-bound, maxval=bound,
                              dtype=jnp.float32)

    def ref_fwd(x):
        return _xla_forward(x, weight.astype(jnp.float32),
                            bias.reshape(1).astype(jnp.float32))

    # (1) Pallas streaming path: ragged multi-tile batch (auto-sized tiles,
    #     partial last block instead of a wrapper-side pad, lane-chunked dot).
    B1 = 4136
    x1 = jax.random.normal(k_x1, (B1, D), dtype=jnp.float32)
    out1 = jax.block_until_ready(logistic_regression_forward(x1, weight, bias))
    assert out1.shape == (B1, 1) and out1.dtype == jnp.float32
    assert bool(jnp.allclose(out1, ref_fwd(x1), atol=1e-5, rtol=1e-5))

    # (2) Forced small-tile Pallas path (block_rows override + ragged tail tile).
    B2 = 300
    x2 = jax.random.normal(k_x2, (B2, D), dtype=jnp.float32)
    out2 = jax.block_until_ready(
        logistic_regression_forward(x2, weight, bias, block_rows=128))
    assert out2.shape == (B2, 1)
    assert bool(jnp.allclose(out2, ref_fwd(x2), atol=1e-5, rtol=1e-5))

    # (3) Tiny problem: auto-dispatches to the fused XLA path (overhead guard).
    B3 = 8
    x3 = jax.random.normal(k_x3, (B3, D), dtype=jnp.float32)
    out3 = jax.block_until_ready(logistic_regression_forward(x3, weight, bias))
    assert out3.shape == (B3, 1)
    assert bool(jnp.allclose(out3, ref_fwd(x3), atol=1e-5, rtol=1e-5))

    print("KERNEL_OK")
</pallas_src>

<mosaic_0001>
module attributes {stable_mosaic.version = 11 : i64} {
  func.func @kernel(%arg0: i32, %arg1: memref<2176x128xf32, #tpu.memory_space<vmem>>, %arg2: memref<8x128xf32, #tpu.memory_space<vmem>>, %arg3: memref<1xf32, #tpu.memory_space<smem>>, %arg4: memref<1x1x2176xf32, #tpu.memory_space<vmem>>) attributes {dimension_semantics = [#tpu.dimension_semantics<parallel>], iteration_bounds = array<i64: 2>, scalar_prefetch = 0 : i64, scratch_operands = 0 : i64, tpu.core_type = #tpu.core_type<tc>, window_params = [{transform_indices = @transform_0, window_bounds = array<i64: 2176, 128>}, {pipeline_mode = #tpu.pipeline_mode<synchronous>, transform_indices = @transform_1, window_bounds = array<i64: 8, 128>}, {transform_indices = @transform_2, window_bounds = array<i64: 1>}, {transform_indices = @transform_3, window_bounds = array<i64: 1, 1, 2176>}]} {
    %c0 = arith.constant 0 : index
    %c0_0 = arith.constant 0 : index
    %0 = vector.load %arg2[%c0, %c0_0] : memref<8x128xf32, #tpu.memory_space<vmem>>, vector<8x128xf32>
    %c0_1 = arith.constant 0 : index
    %1 = memref.load %arg3[%c0_1] : memref<1xf32, #tpu.memory_space<smem>>
    %c0_2 = arith.constant 0 : index
    %c0_3 = arith.constant 0 : index
    %2 = vector.load %arg1[%c0_2, %c0_3] : memref<2176x128xf32, #tpu.memory_space<vmem>>, vector<2048x128xf32>
    %cst = arith.constant dense<0.000000e+00> : vector<8x2048xf32>
    %3 = tpu.matmul %0, %2, %cst {dimension_numbers = #tpu.dot_dimension_numbers<[1], [1], [0], [0], [0, 0, 1, 0], [], []>} : vector<8x128xf32>, vector<2048x128xf32>, vector<8x2048xf32> -> vector<8x2048xf32>
    %4 = vector.extract_strided_slice %3 {offsets = [0, 0], sizes = [1, 2048], strides = [1, 1]} : vector<8x2048xf32> to vector<1x2048xf32>
    %5 = vector.broadcast %1 : f32 to vector<1x2048xf32>
    %6 = arith.addf %4, %5 : vector<1x2048xf32>
    %cst_4 = arith.constant 0.000000e+00 : f32
    %7 = vector.broadcast %cst_4 : f32 to vector<1x2048xf32>
    %8 = arith.subf %7, %6 : vector<1x2048xf32>
    %9 = math.exp %8 : vector<1x2048xf32>
    %cst_5 = arith.constant 1.000000e+00 : f32
    %10 = vector.broadcast %cst_5 : f32 to vector<1x2048xf32>
    %11 = arith.addf %10, %9 : vector<1x2048xf32>
    %cst_6 = arith.constant 1.000000e+00 : f32
    %12 = vector.broadcast %cst_6 : f32 to vector<1x2048xf32>
    %13 = arith.divf %12, %11 : vector<1x2048xf32>
    %c0_7 = arith.constant 0 : index
    %c0_8 = arith.constant 0 : index
    %c0_9 = arith.constant 0 : index
    %14 = vector.load %arg4[%c0_7, %c0_8, %c0_9] : memref<1x1x2176xf32, #tpu.memory_space<vmem>>, vector<1x1x2048xf32>
    %15 = vector.shape_cast %14 : vector<1x1x2048xf32> to vector<1x2048xf32>
    %16 = vector.shape_cast %13 : vector<1x2048xf32> to vector<1x1x2048xf32>
    tpu.vector_store %arg4[%c0_7, %c0_8, %c0_9], %16 {strides = array<i32>} : memref<1x1x2176xf32, #tpu.memory_space<vmem>>, vector<1x1x2048xf32>,
    %c2048 = arith.constant 2048 : index
    %c0_10 = arith.constant 0 : index
    %17 = vector.load %arg1[%c2048, %c0_10] : memref<2176x128xf32, #tpu.memory_space<vmem>>, vector<128x128xf32>
    %cst_11 = arith.constant dense<0.000000e+00> : vector<8x128xf32>
    %18 = tpu.matmul %0, %17, %cst_11 {dimension_numbers = #tpu.dot_dimension_numbers<[1], [1], [0], [0], [0, 0, 1, 0], [], []>} : vector<8x128xf32>, vector<128x128xf32>, vector<8x128xf32> -> vector<8x128xf32>
    %19 = vector.extract_strided_slice %18 {offsets = [0, 0], sizes = [1, 128], strides = [1, 1]} : vector<8x128xf32> to vector<1x128xf32>
    %20 = vector.broadcast %1 : f32 to vector<1x128xf32>
    %21 = arith.addf %19, %20 : vector<1x128xf32>
    %cst_12 = arith.constant 0.000000e+00 : f32
    %22 = vector.broadcast %cst_12 : f32 to vector<1x128xf32>
    %23 = arith.subf %22, %21 : vector<1x128xf32>
    %24 = math.exp %23 : vector<1x128xf32>
    %cst_13 = arith.constant 1.000000e+00 : f32
    %25 = vector.broadcast %cst_13 : f32 to vector<1x128xf32>
    %26 = arith.addf %25, %24 : vector<1x128xf32>
    %cst_14 = arith.constant 1.000000e+00 : f32
    %27 = vector.broadcast %cst_14 : f32 to vector<1x128xf32>
    %28 = arith.divf %27, %26 : vector<1x128xf32>
    %c0_15 = arith.constant 0 : index
    %c0_16 = arith.constant 0 : index
    %c2048_17 = arith.constant 2048 : index
    %29 = vector.load %arg4[%c0_15, %c0_16, %c2048_17] : memref<1x1x2176xf32, #tpu.memory_space<vmem>>, vector<1x1x128xf32>
    %30 = vector.shape_cast %29 : vector<1x1x128xf32> to vector<1x128xf32>
    %31 = vector.shape_cast %28 : vector<1x128xf32> to vector<1x1x128xf32>
    tpu.vector_store %arg4[%c0_15, %c0_16, %c2048_17], %31 {strides = array<i32>} : memref<1x1x2176xf32, #tpu.memory_space<vmem>>, vector<1x1x128xf32>,
    return
  }
  func.func @transform_0(%arg0: i32) -> (i32, i32) {
    %c0_i32 = arith.constant 0 : i32
    %c0_i32_0 = arith.constant 0 : i32
    return %arg0, %c0_i32 : i32, i32
  }
  func.func @transform_1(%arg0: i32) -> (i32, i32) {
    %c0_i32 = arith.constant 0 : i32
    %c0_i32_0 = arith.constant 0 : i32
    %c0_i32_1 = arith.constant 0 : i32
    return %c0_i32, %c0_i32_0 : i32, i32
  }
  func.func @transform_2(%arg0: i32) -> i32 {
    %c0_i32 = arith.constant 0 : i32
    %c0_i32_0 = arith.constant 0 : i32
    return %c0_i32 : i32
  }
  func.func @transform_3(%arg0: i32) -> (i32, i32, i32) {
    %c0_i32 = arith.constant 0 : i32
    %c0_i32_0 = arith.constant 0 : i32
    %c0_i32_1 = arith.constant 0 : i32
    return %arg0, %c0_i32, %c0_i32_0 : i32, i32, i32
  }
}

</mosaic_0001>

<llo_original>
// kernel: tpu_custom_call.1
$region0: #{tpu_custom_call.1}
  #allocation0 [shape = 'u32[]', space=smem, size = 0x4, offset = 0x4, fixed_abs, tag = 'smem constant byte address 0x4 - core index']
  #allocation1 [shape = 'u32[144,128]{1,0:T(1,128)}', space=vmem, size = 0x12000, scoped, tag = 'internal scratch']
  #allocation2 [shape = 'f32[1]{0:T(128)S(6)}', space=smem, size = 0x200, scoped, tag = 'scoped memory for tpu_custom_call.1']
  %s0 = inlined_call_operand.hbm [shape: f32[4136,128], index: 0, kind: input, shape index: {}]
  %s1 = inlined_call_operand.hbm [shape: f32[8,128], index: 1, kind: input, shape index: {}]
  %s2 = inlined_call_operand.<no memory space> [shape: f32[1], index: 2, kind: input, shape index: {}]
  %s3 = inlined_call_operand.hbm [shape: f32[2,1,2176], index: 3, kind: output, shape index: {}]
  %s4 = sld [smem:[#allocation0]]
  $region53: #{tpu_custom_call.1} parent=0
    _
  %s6 = ssub.s32 1, %s4
  %s7 = scalar_select 0, %s6, %s4
  %8 = sst [smem:[#allocation2]] %s2
  $region1: #{tpu_custom_call.1} parent=0
    #allocation3 [shape = 'u8[2228224]{0}', space=vmem, size = 0x220000, scoped, tag = 'input window, operand 0']
    #allocation4 [shape = 's32[2]{0}', space=sflag, size = 0x8, scoped, tag = 'scoped memory for tpu_custom_call.1']
    #allocation5 [shape = 's32[2]{0}', space=sflag, size = 0x8, scoped, tag = 'scoped memory for tpu_custom_call.1']
    #allocation6 [shape = 'u8[4096]{0}', space=vmem, size = 0x1000, scoped, tag = 'input window, operand 1, single buffered']
    #allocation7 [shape = 's32[1]{0}', space=sflag, size = 0x4, scoped, tag = 'scoped memory for tpu_custom_call.1']
    #allocation8 [shape = 'u8[17408]{0}', space=vmem, size = 0x4400, scoped, tag = 'output window, operand 0']
    %9 = vsyncpa [#allocation4], 0
    %s10 = scalar_lea.sflag [#allocation4], 1
    %11 = vsyncpa %s10, 0
    %12 = vsyncpa [#allocation7], 0
    %13 = vsyncpa [#allocation5], 0
    %s14 = scalar_lea.sflag [#allocation5], 1
    %15 = vsyncpa %s14, 0
    loop: start=0, step=1, limit=4
    $region2: #{tpu_custom_call.1} parent=1 // loop_pre_header
      _
    $region3: #{tpu_custom_call.1} parent=1 // loop_header
      %s17 = sphi 0, %s21
      %p18 = scmp.ge.s32.totalorder %s17, 4
      %s27 = sphi 0, %s29
      %s30 = sphi 0, %s27
      %s31 = sphi 0, %s30
      %s47 = sphi 0, %s31
      %s51 = sphi 0, %s51
      %s53 = sphi 0, %s51
      %s54 = sphi 0, %s53
      %s68 = sphi 0, %s54
      %s72 = sphi 0, %s72
      %s74 = sphi 0, %s72
      %s75 = sphi 0, %s74
      %s89 = sphi 0, %s75
      %s95 = sphi 0, %s97
      %s98 = sphi 0, %s95
      %s99 = sphi 0, %s98
      %s115 = sphi 0, %s99
    $region4: #{tpu_custom_call.1} parent=1 // loop_header_branch
      %20 = sbr.rel (%p18) target = $region8
    $region5: #{tpu_custom_call.1} parent=1 // loop_body
      %s22 = ssub.s32 %s17, 1
      %s23 = ssub.s32 %s17, 2
      %s24 = sadd.s32 %s17, 1
      %s25 = ssub.s32 %s17, %s24
      %p26 = scmp.eq.s32.totalorder %s25, 0
      %s28 = sadd.s32 %s27, 1
      %s29 = scalar_select %p26, %s27, %s28
      %p32 = pneg %p26
      %p33 = scmp.eq.s32.totalorder %s17, 1
      %p34 = por %p32, %p33
      %p35 = scmp.ne.s32.totalorder %s27, %s30
      %p36 = scmp.eq.s32.totalorder %s17, 0
      %p37 = por %p35, %p36
      %p38 = scmp.ne.s32.totalorder %s27, %s30
      %p39 = scmp.eq.s32.totalorder %s22, 1
      %p40 = por %p38, %p39
      %p41 = scmp.ne.s32.totalorder %s30, %s31
      %p42 = scmp.eq.s32.totalorder %s22, 0
      %p43 = por %p41, %p42
      %p44 = scmp.ne.s32.totalorder %s30, %s31
      %p45 = scmp.eq.s32.totalorder %s23, 1
      %p46 = por %p44, %p45
      %p48 = scmp.ne.s32.totalorder %s31, %s47
      %p49 = scmp.eq.s32.totalorder %s23, 0
      %p50 = por %p48, %p49
      %s52 = sadd.s32 %s51, 1
      %p55 = scmp.eq.s32.totalorder %s17, 1
      %p56 = scmp.ne.s32.totalorder %s51, %s53
      %p57 = scmp.eq.s32.totalorder %s17, 0
      %p58 = por %p56, %p57
      %p59 = scmp.ne.s32.totalorder %s51, %s53
      %p60 = scmp.eq.s32.totalorder %s22, 1
      %p61 = por %p59, %p60
      %p62 = scmp.ne.s32.totalorder %s53, %s54
      %p63 = scmp.eq.s32.totalorder %s22, 0
      %p64 = por %p62, %p63
      %p65 = scmp.ne.s32.totalorder %s53, %s54
      %p66 = scmp.eq.s32.totalorder %s23, 1
      %p67 = por %p65, %p66
      %p69 = scmp.ne.s32.totalorder %s54, %s68
      %p70 = scmp.eq.s32.totalorder %s23, 0
      %p71 = por %p69, %p70
      %s73 = sadd.s32 %s72, 1
      %p76 = scmp.eq.s32.totalorder %s17, 1
      %p77 = scmp.ne.s32.totalorder %s72, %s74
      %p78 = scmp.eq.s32.totalorder %s17, 0
      %p79 = por %p77, %p78
      %p80 = scmp.ne.s32.totalorder %s72, %s74
      %p81 = scmp.eq.s32.totalorder %s22, 1
      %p82 = por %p80, %p81
      %p83 = scmp.ne.s32.totalorder %s74, %s75
      %p84 = scmp.eq.s32.totalorder %s22, 0
      %p85 = por %p83, %p84
      %p86 = scmp.ne.s32.totalorder %s74, %s75
      %p87 = scmp.eq.s32.totalorder %s23, 1
      %p88 = por %p86, %p87
      %p90 = scmp.ne.s32.totalorder %s75, %s89
      %p91 = scmp.eq.s32.totalorder %s23, 0
      %p92 = por %p90, %p91
      %s93 = ssub.s32 %s17, %s24
      %p94 = scmp.eq.s32.totalorder %s93, 0
      %s96 = sadd.s32 %s95, 1
      %s97 = scalar_select %p94, %s95, %s96
      %p100 = pneg %p94
      %p101 = scmp.eq.s32.totalorder %s17, 1
      %p102 = por %p100, %p101
      %p103 = scmp.ne.s32.totalorder %s95, %s98
      %p104 = scmp.eq.s32.totalorder %s17, 0
      %p105 = por %p103, %p104
      %p106 = scmp.ne.s32.totalorder %s95, %s98
      %p107 = scmp.eq.s32.totalorder %s22, 1
      %p108 = por %p106, %p107
      %p109 = scmp.ne.s32.totalorder %s98, %s99
      %p110 = scmp.eq.s32.totalorder %s22, 0
      %p111 = por %p109, %p110
      %p112 = scmp.ne.s32.totalorder %s98, %s99
      %p113 = scmp.eq.s32.totalorder %s23, 1
      %p114 = por %p112, %p113
      %p116 = scmp.ne.s32.totalorder %s99, %s115
      %p117 = scmp.eq.s32.totalorder %s23, 0
      %p118 = por %p116, %p117
      %p119 = scmp.le.s32.totalorder 1, %s17
      %p120 = scmp.lt.s32.totalorder %s17, 3
      %p121 = pnand %p119, %p120
      %p122 = pneg %p121
      // Predicated region
      $region9: #{tpu_custom_call.1} parent=5 // pred_check
        _
      $region10: #{tpu_custom_call.1} parent=5 // pred_check_branch
        %124 = sbr.rel (%p121) target = $region12
      $region11: #{tpu_custom_call.1} parent=5 // pred_region
        %s125 = ssub.s32 %s17, 1
        // Predicated region
        $region13: #{tpu_custom_call.1} parent=11 // pred_check
          %p126 = pneg %p64
        $region14: #{tpu_custom_call.1} parent=11 // pred_check_branch
          %128 = sbr.rel (%p126) target = $region16
        $region15: #{tpu_custom_call.1} parent=11 // pred_region
          %s130 = ssub.s32 128, 128
          %131 = vsyncadd [#allocation7], %s130
          %s133 = sshll.u32 [#allocation6], 4
          %s134 = int_to_ptr.vmem [resolvable:$true] %s133
          %136 = dma.hbm_to_vmem [thread:$0]  %s1, 128, %s134, [#allocation7]
        $region16: #{tpu_custom_call.1} parent=11 // pred_fallthru
          _
        // Predicated region
        $region17: #{tpu_custom_call.1} parent=11 // pred_check
          %p137 = pneg %p85
        $region18: #{tpu_custom_call.1} parent=11 // pred_check_branch
          %139 = sbr.rel (%p137) target = $region20
        $region19: #{tpu_custom_call.1} parent=11 // pred_region
          _
        $region20: #{tpu_custom_call.1} parent=11 // pred_fallthru
          _
      $region12: #{tpu_custom_call.1} parent=5 // pred_fallthru
        _
      %p140 = scmp.lt.s32.totalorder %s17, 2
      // Predicated region
      $region21: #{tpu_custom_call.1} parent=5 // pred_check
        %p141 = pneg %p140
      $region22: #{tpu_custom_call.1} parent=5 // pred_check_branch
        %143 = sbr.rel (%p141) target = $region24
      $region23: #{tpu_custom_call.1} parent=5 // pred_region
        // Predicated region
        $region25: #{tpu_custom_call.1} parent=23 // pred_check
          %p144 = pneg %p37
        $region26: #{tpu_custom_call.1} parent=23 // pred_check_branch
          %146 = sbr.rel (%p144) target = $region28
        $region27: #{tpu_custom_call.1} parent=23 // pred_region
          %s147 = sand.u32 %s27, 1
          %s148 = scalar_lea.sflag [#allocation4], %s147
          %s149 = sand.u32 %s27, 1
          %s150 = smul.addr %s149, 2176
          %s151 = scalar_lea.vmem [#allocation3], %s150
          %s152 = smul.u32 272, %s17
          %s153 = ssub.s32 517, %s152
          %p154 = scmp.lt.s32.totalorder %s153, 272
          %s155 = scalar_select %p154, %s153, 272
          %s156 = smul.u32 128, %s155
          %s158 = ssub.s32 34816, %s156
          %159 = vsyncadd %s148, %s158
          %p160 = scmp.ne.s32.totalorder 0, %s156
          %s161 = smul.addr %s152, 128
          %s162 = scalar_lea.hbm %s0, %s161
          %s163 = smul.u32 8, %s155
          %s164 = sshll.u32 %s151, 4
          %s165 = int_to_ptr.vmem [resolvable:$true] %s164
          %s166 = sshll.u32 %s163, 4
          %170 = dma.hbm_to_vmem [thread:$0]  (%p160), %s162, %s166, %s165, %s148, 128, 128, 8
        $region28: #{tpu_custom_call.1} parent=23 // pred_fallthru
          _
      $region24: #{tpu_custom_call.1} parent=5 // pred_fallthru
        _
      %p171 = scmp.le.s32.totalorder 1, %s17
      %p172 = scmp.lt.s32.totalorder %s17, 3
      %p173 = pnand %p171, %p172
      %p174 = pneg %p173
      // Predicated region
      $region29: #{tpu_custom_call.1} parent=5 // pred_check
        _
      $region30: #{tpu_custom_call.1} parent=5 // pred_check_branch
        %176 = sbr.rel (%p173) target = $region32
      $region31: #{tpu_custom_call.1} parent=5 // pred_region
        %s177 = ssub.s32 %s17, 1
        %s178 = sand.u32 %s30, 1
        %s179 = scalar_lea.sflag [#allocation4], %s178
        %s180 = sand.u32 %s30, 1
        %s181 = smul.addr %s180, 2176
        %s182 = scalar_lea.vmem [#allocation3], %s181
        // Predicated region
        $region33: #{tpu_custom_call.1} parent=31 // pred_check
          %p183 = pneg %p43
        $region34: #{tpu_custom_call.1} parent=31 // pred_check_branch
          %185 = sbr.rel (%p183) target = $region36
        $region35: #{tpu_custom_call.1} parent=31 // pred_region
          %186 = dma.done %s179, 34816
        $region36: #{tpu_custom_call.1} parent=31 // pred_fallthru
          _
        // Predicated region
        $region37: #{tpu_custom_call.1} parent=31 // pred_check
          %p187 = pneg %p64
        $region38: #{tpu_custom_call.1} parent=31 // pred_check_branch
          %189 = sbr.rel (%p187) target = $region40
        $region39: #{tpu_custom_call.1} parent=31 // pred_region
          %190 = dma.done [#allocation7], 128
        $region40: #{tpu_custom_call.1} parent=31 // pred_fallthru
          _
        %s191 = sand.u32 %s30, 1
        %s192 = scalar_lea.sflag [#allocation4], %s191
        %s193 = sand.u32 %s30, 1
        %s194 = smul.addr %s193, 2176
        %s195 = scalar_lea.vmem [#allocation3], %s194
        %p196 = pneg %p43
        %p197 = pneg %p40
        %p198 = pneg %p64
        %p199 = pneg %p61
        %p200 = pneg %p85
        %p201 = pneg %p82
        %p202 = pneg %p111
        %p203 = pneg %p108
        %s204 = sand.u32 %s98, 1
        %s205 = scalar_lea.sflag [#allocation5], %s204
        %s206 = sand.u32 %s98, 1
        %s207 = smul.addr %s206, 17
        %s208 = scalar_lea.vmem [#allocation8], %s207
        %s209 = smul.u32 272, %s22
        %s210 = ssub.s32 517, %s209
        %p211 = scmp.lt.s32.totalorder %s210, 272
        %s212 = scalar_select %p211, %s210, 272
        %s213 = smul.u32 128, %s212
        %v214 = vld [vmem:[#allocation6] sm:$0xff]
        %s215 = sld [smem:[#allocation2]]
        %v216 = vld [vmem:[%s182] sm:$0xff]
        %v217 = vld [vmem:[%s182 + $0x8] sm:$0xff]
        %v218 = vld [vmem:[%s182 + $0x10] sm:$0xff]
        %v219 = vld [vmem:[%s182 + $0x18] sm:$0xff]
        %v220 = vld [vmem:[%s182 + $0x20] sm:$0xff]
        %v221 = vld [vmem:[%s182 + $0x28] sm:$0xff]
        %v222 = vld [vmem:[%s182 + $0x30] sm:$0xff]
        %v223 = vld [vmem:[%s182 + $0x38] sm:$0xff]
        %v224 = vld [vmem:[%s182 + $0x40] sm:$0xff]
        %v225 = vld [vmem:[%s182 + $0x48] sm:$0xff]
        %v226 = vld [vmem:[%s182 + $0x50] sm:$0xff]
        %v227 = vld [vmem:[%s182 + $0x58] sm:$0xff]
        %v228 = vld [vmem:[%s182 + $0x60] sm:$0xff]
        %v229 = vld [vmem:[%s182 + $0x68] sm:$0xff]
        %v230 = vld [vmem:[%s182 + $0x70] sm:$0xff]
        %v231 = vld [vmem:[%s182 + $0x78] sm:$0xff]
        %v232 = vld [vmem:[%s182 + $0x80] sm:$0xff]
        %v233 = vld [vmem:[%s182 + $0x88] sm:$0xff]
        %v234 = vld [vmem:[%s182 + $0x90] sm:$0xff]
        %v235 = vld [vmem:[%s182 + $0x98] sm:$0xff]
        %v236 = vld [vmem:[%s182 + $0xa0] sm:$0xff]
        %v237 = vld [vmem:[%s182 + $0xa8] sm:$0xff]
        %v238 = vld [vmem:[%s182 + $0xb0] sm:$0xff]
        %v239 = vld [vmem:[%s182 + $0xb8] sm:$0xff]
        %v240 = vld [vmem:[%s182 + $0xc0] sm:$0xff]
        %v241 = vld [vmem:[%s182 + $0xc8] sm:$0xff]
        %v242 = vld [vmem:[%s182 + $0xd0] sm:$0xff]
        %v243 = vld [vmem:[%s182 + $0xd8] sm:$0xff]
        %v244 = vld [vmem:[%s182 + $0xe0] sm:$0xff]
        %v245 = vld [vmem:[%s182 + $0xe8] sm:$0xff]
        %v246 = vld [vmem:[%s182 + $0xf0] sm:$0xff]
        %v247 = vld [vmem:[%s182 + $0xf8] sm:$0xff]
        %v248 = vld [vmem:[%s182 + $0x100] sm:$0xff]
        %v249 = vld [vmem:[%s182 + $0x108] sm:$0xff]
        %v250 = vld [vmem:[%s182 + $0x110] sm:$0xff]
        %v251 = vld [vmem:[%s182 + $0x118] sm:$0xff]
        %v252 = vld [vmem:[%s182 + $0x120] sm:$0xff]
        %v253 = vld [vmem:[%s182 + $0x128] sm:$0xff]
        %v254 = vld [vmem:[%s182 + $0x130] sm:$0xff]
        %v255 = vld [vmem:[%s182 + $0x138] sm:$0xff]
        %v256 = vld [vmem:[%s182 + $0x140] sm:$0xff]
        %v257 = vld [vmem:[%s182 + $0x148] sm:$0xff]
        %v258 = vld [vmem:[%s182 + $0x150] sm:$0xff]
        %v259 = vld [vmem:[%s182 + $0x158] sm:$0xff]
        %v260 = vld [vmem:[%s182 + $0x160] sm:$0xff]
        %v261 = vld [vmem:[%s182 + $0x168] sm:$0xff]
        %v262 = vld [vmem:[%s182 + $0x170] sm:$0xff]
        %v263 = vld [vmem:[%s182 + $0x178] sm:$0xff]
        %v264 = vld [vmem:[%s182 + $0x180] sm:$0xff]
        %v265 = vld [vmem:[%s182 + $0x188] sm:$0xff]
        %v266 = vld [vmem:[%s182 + $0x190] sm:$0xff]
        %v267 = vld [vmem:[%s182 + $0x198] sm:$0xff]
        %v268 = vld [vmem:[%s182 + $0x1a0] sm:$0xff]
        %v269 = vld [vmem:[%s182 + $0x1a8] sm:$0xff]
        %v270 = vld [vmem:[%s182 + $0x1b0] sm:$0xff]
        %v271 = vld [vmem:[%s182 + $0x1b8] sm:$0xff]
        %v272 = vld [vmem:[%s182 + $0x1c0] sm:$0xff]
        %v273 = vld [vmem:[%s182 + $0x1c8] sm:$0xff]
        %v274 = vld [vmem:[%s182 + $0x1d0] sm:$0xff]
        %v275 = vld [vmem:[%s182 + $0x1d8] sm:$0xff]
        %v276 = vld [vmem:[%s182 + $0x1e0] sm:$0xff]
        %v277 = vld [vmem:[%s182 + $0x1e8] sm:$0xff]
        %v278 = vld [vmem:[%s182 + $0x1f0] sm:$0xff]
        %v279 = vld [vmem:[%s182 + $0x1f8] sm:$0xff]
        %v280 = vld [vmem:[%s182 + $0x200] sm:$0xff]
        %v281 = vld [vmem:[%s182 + $0x208] sm:$0xff]
        %v282 = vld [vmem:[%s182 + $0x210] sm:$0xff]
        %v283 = vld [vmem:[%s182 + $0x218] sm:$0xff]
        %v284 = vld [vmem:[%s182 + $0x220] sm:$0xff]
        %v285 = vld [vmem:[%s182 + $0x228] sm:$0xff]
        %v286 = vld [vmem:[%s182 + $0x230] sm:$0xff]
        %v287 = vld [vmem:[%s182 + $0x238] sm:$0xff]
        %v288 = vld [vmem:[%s182 + $0x240] sm:$0xff]
        %v289 = vld [vmem:[%s182 + $0x248] sm:$0xff]
        %v290 = vld [vmem:[%s182 + $0x250] sm:$0xff]
        %v291 = vld [vmem:[%s182 + $0x258] sm:$0xff]
        %v292 = vld [vmem:[%s182 + $0x260] sm:$0xff]
        %v293 = vld [vmem:[%s182 + $0x268] sm:$0xff]
        %v294 = vld [vmem:[%s182 + $0x270] sm:$0xff]
        %v295 = vld [vmem:[%s182 + $0x278] sm:$0xff]
        %v296 = vld [vmem:[%s182 + $0x280] sm:$0xff]
        %v297 = vld [vmem:[%s182 + $0x288] sm:$0xff]
        %v298 = vld [vmem:[%s182 + $0x290] sm:$0xff]
        %v299 = vld [vmem:[%s182 + $0x298] sm:$0xff]
        %v300 = vld [vmem:[%s182 + $0x2a0] sm:$0xff]
        %v301 = vld [vmem:[%s182 + $0x2a8] sm:$0xff]
        %v302 = vld [vmem:[%s182 + $0x2b0] sm:$0xff]
        %v303 = vld [vmem:[%s182 + $0x2b8] sm:$0xff]
        %v304 = vld [vmem:[%s182 + $0x2c0] sm:$0xff]
        %v305 = vld [vmem:[%s182 + $0x2c8] sm:$0xff]
        %v306 = vld [vmem:[%s182 + $0x2d0] sm:$0xff]
        %v307 = vld [vmem:[%s182 + $0x2d8] sm:$0xff]
        %v308 = vld [vmem:[%s182 + $0x2e0] sm:$0xff]
        %v309 = vld [vmem:[%s182 + $0x2e8] sm:$0xff]
        %v310 = vld [vmem:[%s182 + $0x2f0] sm:$0xff]
        %v311 = vld [vmem:[%s182 + $0x2f8] sm:$0xff]
        %v312 = vld [vmem:[%s182 + $0x300] sm:$0xff]
        %v313 = vld [vmem:[%s182 + $0x308] sm:$0xff]
        %v314 = vld [vmem:[%s182 + $0x310] sm:$0xff]
        %v315 = vld [vmem:[%s182 + $0x318] sm:$0xff]
        %v316 = vld [vmem:[%s182 + $0x320] sm:$0xff]
        %v317 = vld [vmem:[%s182 + $0x328] sm:$0xff]
        %v318 = vld [vmem:[%s182 + $0x330] sm:$0xff]
        %v319 = vld [vmem:[%s182 + $0x338] sm:$0xff]
        %v320 = vld [vmem:[%s182 + $0x340] sm:$0xff]
        %v321 = vld [vmem:[%s182 + $0x348] sm:$0xff]
        %v322 = vld [vmem:[%s182 + $0x350] sm:$0xff]
        %v323 = vld [vmem:[%s182 + $0x358] sm:$0xff]
        %v324 = vld [vmem:[%s182 + $0x360] sm:$0xff]
        %v325 = vld [vmem:[%s182 + $0x368] sm:$0xff]
        %v326 = vld [vmem:[%s182 + $0x370] sm:$0xff]
        %v327 = vld [vmem:[%s182 + $0x378] sm:$0xff]
        %v328 = vld [vmem:[%s182 + $0x380] sm:$0xff]
        %v329 = vld [vmem:[%s182 + $0x388] sm:$0xff]
        %v330 = vld [vmem:[%s182 + $0x390] sm:$0xff]
        %v331 = vld [vmem:[%s182 + $0x398] sm:$0xff]
        %v332 = vld [vmem:[%s182 + $0x3a0] sm:$0xff]
        %v333 = vld [vmem:[%s182 + $0x3a8] sm:$0xff]
        %v334 = vld [vmem:[%s182 + $0x3b0] sm:$0xff]
        %v335 = vld [vmem:[%s182 + $0x3b8] sm:$0xff]
        %v336 = vld [vmem:[%s182 + $0x3c0] sm:$0xff]
        %v337 = vld [vmem:[%s182 + $0x3c8] sm:$0xff]
        %v338 = vld [vmem:[%s182 + $0x3d0] sm:$0xff]
        %v339 = vld [vmem:[%s182 + $0x3d8] sm:$0xff]
        %v340 = vld [vmem:[%s182 + $0x3e0] sm:$0xff]
        %v341 = vld [vmem:[%s182 + $0x3e8] sm:$0xff]
        %v342 = vld [vmem:[%s182 + $0x3f0] sm:$0xff]
        %v343 = vld [vmem:[%s182 + $0x3f8] sm:$0xff]
        %v344 = vld [vmem:[%s182 + $0x400] sm:$0xff]
        %v345 = vld [vmem:[%s182 + $0x408] sm:$0xff]
        %v346 = vld [vmem:[%s182 + $0x410] sm:$0xff]
        %v347 = vld [vmem:[%s182 + $0x418] sm:$0xff]
        %v348 = vld [vmem:[%s182 + $0x420] sm:$0xff]
        %v349 = vld [vmem:[%s182 + $0x428] sm:$0xff]
        %v350 = vld [vmem:[%s182 + $0x430] sm:$0xff]
        %v351 = vld [vmem:[%s182 + $0x438] sm:$0xff]
        %v352 = vld [vmem:[%s182 + $0x440] sm:$0xff]
        %v353 = vld [vmem:[%s182 + $0x448] sm:$0xff]
        %v354 = vld [vmem:[%s182 + $0x450] sm:$0xff]
        %v355 = vld [vmem:[%s182 + $0x458] sm:$0xff]
        %v356 = vld [vmem:[%s182 + $0x460] sm:$0xff]
        %v357 = vld [vmem:[%s182 + $0x468] sm:$0xff]
        %v358 = vld [vmem:[%s182 + $0x470] sm:$0xff]
        %v359 = vld [vmem:[%s182 + $0x478] sm:$0xff]
        %v360 = vld [vmem:[%s182 + $0x480] sm:$0xff]
        %v361 = vld [vmem:[%s182 + $0x488] sm:$0xff]
        %v362 = vld [vmem:[%s182 + $0x490] sm:$0xff]
        %v363 = vld [vmem:[%s182 + $0x498] sm:$0xff]
        %v364 = vld [vmem:[%s182 + $0x4a0] sm:$0xff]
        %v365 = vld [vmem:[%s182 + $0x4a8] sm:$0xff]
        %v366 = vld [vmem:[%s182 + $0x4b0] sm:$0xff]
        %v367 = vld [vmem:[%s182 + $0x4b8] sm:$0xff]
        %v368 = vld [vmem:[%s182 + $0x4c0] sm:$0xff]
        %v369 = vld [vmem:[%s182 + $0x4c8] sm:$0xff]
        %v370 = vld [vmem:[%s182 + $0x4d0] sm:$0xff]
        %v371 = vld [vmem:[%s182 + $0x4d8] sm:$0xff]
        %v372 = vld [vmem:[%s182 + $0x4e0] sm:$0xff]
        %v373 = vld [vmem:[%s182 + $0x4e8] sm:$0xff]
        %v374 = vld [vmem:[%s182 + $0x4f0] sm:$0xff]
        %v375 = vld [vmem:[%s182 + $0x4f8] sm:$0xff]
        %v376 = vld [vmem:[%s182 + $0x500] sm:$0xff]
        %v377 = vld [vmem:[%s182 + $0x508] sm:$0xff]
        %v378 = vld [vmem:[%s182 + $0x510] sm:$0xff]
        %v379 = vld [vmem:[%s182 + $0x518] sm:$0xff]
        %v380 = vld [vmem:[%s182 + $0x520] sm:$0xff]
        %v381 = vld [vmem:[%s182 + $0x528] sm:$0xff]
        %v382 = vld [vmem:[%s182 + $0x530] sm:$0xff]
        %v383 = vld [vmem:[%s182 + $0x538] sm:$0xff]
        %v384 = vld [vmem:[%s182 + $0x540] sm:$0xff]
        %v385 = vld [vmem:[%s182 + $0x548] sm:$0xff]
        %v386 = vld [vmem:[%s182 + $0x550] sm:$0xff]
        %v387 = vld [vmem:[%s182 + $0x558] sm:$0xff]
        %v388 = vld [vmem:[%s182 + $0x560] sm:$0xff]
        %v389 = vld [vmem:[%s182 + $0x568] sm:$0xff]
        %v390 = vld [vmem:[%s182 + $0x570] sm:$0xff]
        %v391 = vld [vmem:[%s182 + $0x578] sm:$0xff]
        %v392 = vld [vmem:[%s182 + $0x580] sm:$0xff]
        %v393 = vld [vmem:[%s182 + $0x588] sm:$0xff]
        %v394 = vld [vmem:[%s182 + $0x590] sm:$0xff]
        %v395 = vld [vmem:[%s182 + $0x598] sm:$0xff]
        %v396 = vld [vmem:[%s182 + $0x5a0] sm:$0xff]
        %v397 = vld [vmem:[%s182 + $0x5a8] sm:$0xff]
        %v398 = vld [vmem:[%s182 + $0x5b0] sm:$0xff]
        %v399 = vld [vmem:[%s182 + $0x5b8] sm:$0xff]
        %v400 = vld [vmem:[%s182 + $0x5c0] sm:$0xff]
        %v401 = vld [vmem:[%s182 + $0x5c8] sm:$0xff]
        %v402 = vld [vmem:[%s182 + $0x5d0] sm:$0xff]
        %v403 = vld [vmem:[%s182 + $0x5d8] sm:$0xff]
        %v404 = vld [vmem:[%s182 + $0x5e0] sm:$0xff]
        %v405 = vld [vmem:[%s182 + $0x5e8] sm:$0xff]
        %v406 = vld [vmem:[%s182 + $0x5f0] sm:$0xff]
        %v407 = vld [vmem:[%s182 + $0x5f8] sm:$0xff]
        %v408 = vld [vmem:[%s182 + $0x600] sm:$0xff]
        %v409 = vld [vmem:[%s182 + $0x608] sm:$0xff]
        %v410 = vld [vmem:[%s182 + $0x610] sm:$0xff]
        %v411 = vld [vmem:[%s182 + $0x618] sm:$0xff]
        %v412 = vld [vmem:[%s182 + $0x620] sm:$0xff]
        %v413 = vld [vmem:[%s182 + $0x628] sm:$0xff]
        %v414 = vld [vmem:[%s182 + $0x630] sm:$0xff]
        %v415 = vld [vmem:[%s182 + $0x638] sm:$0xff]
        %v416 = vld [vmem:[%s182 + $0x640] sm:$0xff]
        %v417 = vld [vmem:[%s182 + $0x648] sm:$0xff]
        %v418 = vld [vmem:[%s182 + $0x650] sm:$0xff]
        %v419 = vld [vmem:[%s182 + $0x658] sm:$0xff]
        %v420 = vld [vmem:[%s182 + $0x660] sm:$0xff]
        %v421 = vld [vmem:[%s182 + $0x668] sm:$0xff]
        %v422 = vld [vmem:[%s182 + $0x670] sm:$0xff]
        %v423 = vld [vmem:[%s182 + $0x678] sm:$0xff]
        %v424 = vld [vmem:[%s182 + $0x680] sm:$0xff]
        %v425 = vld [vmem:[%s182 + $0x688] sm:$0xff]
        %v426 = vld [vmem:[%s182 + $0x690] sm:$0xff]
        %v427 = vld [vmem:[%s182 + $0x698] sm:$0xff]
        %v428 = vld [vmem:[%s182 + $0x6a0] sm:$0xff]
        %v429 = vld [vmem:[%s182 + $0x6a8] sm:$0xff]
        %v430 = vld [vmem:[%s182 + $0x6b0] sm:$0xff]
        %v431 = vld [vmem:[%s182 + $0x6b8] sm:$0xff]
        %v432 = vld [vmem:[%s182 + $0x6c0] sm:$0xff]
        %v433 = vld [vmem:[%s182 + $0x6c8] sm:$0xff]
        %v434 = vld [vmem:[%s182 + $0x6d0] sm:$0xff]
        %v435 = vld [vmem:[%s182 + $0x6d8] sm:$0xff]
        %v436 = vld [vmem:[%s182 + $0x6e0] sm:$0xff]
        %v437 = vld [vmem:[%s182 + $0x6e8] sm:$0xff]
        %v438 = vld [vmem:[%s182 + $0x6f0] sm:$0xff]
        %v439 = vld [vmem:[%s182 + $0x6f8] sm:$0xff]
        %v440 = vld [vmem:[%s182 + $0x700] sm:$0xff]
        %v441 = vld [vmem:[%s182 + $0x708] sm:$0xff]
        %v442 = vld [vmem:[%s182 + $0x710] sm:$0xff]
        %v443 = vld [vmem:[%s182 + $0x718] sm:$0xff]
        %v444 = vld [vmem:[%s182 + $0x720] sm:$0xff]
        %v445 = vld [vmem:[%s182 + $0x728] sm:$0xff]
        %v446 = vld [vmem:[%s182 + $0x730] sm:$0xff]
        %v447 = vld [vmem:[%s182 + $0x738] sm:$0xff]
        %v448 = vld [vmem:[%s182 + $0x740] sm:$0xff]
        %v449 = vld [vmem:[%s182 + $0x748] sm:$0xff]
        %v450 = vld [vmem:[%s182 + $0x750] sm:$0xff]
        %v451 = vld [vmem:[%s182 + $0x758] sm:$0xff]
        %v452 = vld [vmem:[%s182 + $0x760] sm:$0xff]
        %v453 = vld [vmem:[%s182 + $0x768] sm:$0xff]
        %v454 = vld [vmem:[%s182 + $0x770] sm:$0xff]
        %v455 = vld [vmem:[%s182 + $0x778] sm:$0xff]
        %v456 = vld [vmem:[%s182 + $0x780] sm:$0xff]
        %v457 = vld [vmem:[%s182 + $0x788] sm:$0xff]
        %v458 = vld [vmem:[%s182 + $0x790] sm:$0xff]
        %v459 = vld [vmem:[%s182 + $0x798] sm:$0xff]
        %v460 = vld [vmem:[%s182 + $0x7a0] sm:$0xff]
        %v461 = vld [vmem:[%s182 + $0x7a8] sm:$0xff]
        %v462 = vld [vmem:[%s182 + $0x7b0] sm:$0xff]
        %v463 = vld [vmem:[%s182 + $0x7b8] sm:$0xff]
        %v464 = vld [vmem:[%s182 + $0x7c0] sm:$0xff]
        %v465 = vld [vmem:[%s182 + $0x7c8] sm:$0xff]
        %v466 = vld [vmem:[%s182 + $0x7d0] sm:$0xff]
        %v467 = vld [vmem:[%s182 + $0x7d8] sm:$0xff]
        %v468 = vld [vmem:[%s182 + $0x7e0] sm:$0xff]
        %v469 = vld [vmem:[%s182 + $0x7e8] sm:$0xff]
        %v470 = vld [vmem:[%s182 + $0x7f0] sm:$0xff]
        %v471 = vld [vmem:[%s182 + $0x7f8] sm:$0xff]
        %472 = vmatprep.subr.mxu0 0.0
        %473 = vmatpush1.xpose.msra.mxu0 %v216
        %474 = vmatprep.subr.mxu0 0.0
        %475 = vmatpush1.xpose.msra.mxu0 %v217
        %476 = vmatprep.subr.mxu0 0.0
        %477 = vmatpush1.xpose.msra.mxu0 %v218
        %478 = vmatprep.subr.mxu0 0.0
        %479 = vmatpush1.xpose.msra.mxu0 %v219
        %480 = vmatprep.subr.mxu0 0.0
        %481 = vmatpush1.xpose.msra.mxu0 %v220
        %482 = vmatprep.subr.mxu0 0.0
        %483 = vmatpush1.xpose.msra.mxu0 %v221
        %484 = vmatprep.subr.mxu0 0.0
        %485 = vmatpush1.xpose.msra.mxu0 %v222
        %486 = vmatprep.subr.mxu0 0.0
        %487 = vmatpush1.xpose.msra.mxu0 %v223
        %488 = vmatprep.subr.mxu0 0.0
        %489 = vmatpush1.xpose.msra.mxu0 %v224
        %490 = vmatprep.subr.mxu0 0.0
        %491 = vmatpush1.xpose.msra.mxu0 %v225
        %492 = vmatprep.subr.mxu0 0.0
        %493 = vmatpush1.xpose.msra.mxu0 %v226
        %494 = vmatprep.subr.mxu0 0.0
        %495 = vmatpush1.xpose.msra.mxu0 %v227
        %496 = vmatprep.subr.mxu0 0.0
        %497 = vmatpush1.xpose.msra.mxu0 %v228
        %498 = vmatprep.subr.mxu0 0.0
        %499 = vmatpush1.xpose.msra.mxu0 %v229
        %500 = vmatprep.subr.mxu0 0.0
        %501 = vmatpush1.xpose.msra.mxu0 %v230
        %502 = vmatprep.subr.mxu0 0.0
        %503 = vmatpush1.xpose.msra.mxu0 %v231
        %504 = vmatprep.subr.mxu0 0.0
        %505 = vmatpush1.xpose.msra.mxu0 %v232
        %506 = vmatprep.subr.mxu0 0.0
        %507 = vmatpush1.xpose.msra.mxu0 %v233
        %508 = vmatprep.subr.mxu0 0.0
        %509 = vmatpush1.xpose.msra.mxu0 %v234
        %510 = vmatprep.subr.mxu0 0.0
        %511 = vmatpush1.xpose.msra.mxu0 %v235
        %512 = vmatprep.subr.mxu0 0.0
        %513 = vmatpush1.xpose.msra.mxu0 %v236
        %514 = vmatprep.subr.mxu0 0.0
        %515 = vmatpush1.xpose.msra.mxu0 %v237
        %516 = vmatprep.subr.mxu0 0.0
        %517 = vmatpush1.xpose.msra.mxu0 %v238
        %518 = vmatprep.subr.mxu0 0.0
        %519 = vmatpush1.xpose.msra.mxu0 %v239
        %520 = vmatprep.subr.mxu0 0.0
        %521 = vmatpush1.xpose.msra.mxu0 %v240
        %522 = vmatprep.subr.mxu0 0.0
        %523 = vmatpush1.xpose.msra.mxu0 %v241
        %524 = vmatprep.subr.mxu0 0.0
        %525 = vmatpush1.xpose.msra.mxu0 %v242
        %526 = vmatprep.subr.mxu0 0.0
        %527 = vmatpush1.xpose.msra.mxu0 %v243
        %528 = vmatprep.subr.mxu0 0.0
        %529 = vmatpush1.xpose.msra.mxu0 %v244
        %530 = vmatprep.subr.mxu0 0.0
        %531 = vmatpush1.xpose.msra.mxu0 %v245
        %532 = vmatprep.subr.mxu0 0.0
        %533 = vmatpush1.xpose.msra.mxu0 %v246
        %534 = vmatprep.subr.mxu0 0.0
        %535 = vmatpush1.xpose.msra.mxu0 %v247
        %536 = vmatprep.mubr.f32.mxu0 0.0
        %537 = vmatmul.mubr.f32.gmra.mrb[0].mxu0 %v214
        %v538 = vpop.f32.mrb[0].mxu0
        %v539 = vadd.f32 0.0, %v538
        %v540 = vpop.f32.mrb[0].mxu0
        %v541 = vadd.f32 0.0, %v540
        %542 = vdwg.mxu0
        %543 = vmatprep.subr.mxu0 0.0
        %544 = vmatpush1.xpose.msra.mxu0 %v248
        %545 = vmatprep.subr.mxu0 0.0
        %546 = vmatpush1.xpose.msra.mxu0 %v249
        %547 = vmatprep.subr.mxu0 0.0
        %548 = vmatpush1.xpose.msra.mxu0 %v250
        %549 = vmatprep.subr.mxu0 0.0
        %550 = vmatpush1.xpose.msra.mxu0 %v251
        %551 = vmatprep.subr.mxu0 0.0
        %552 = vmatpush1.xpose.msra.mxu0 %v252
        %553 = vmatprep.subr.mxu0 0.0
        %554 = vmatpush1.xpose.msra.mxu0 %v253
        %555 = vmatprep.subr.mxu0 0.0
        %556 = vmatpush1.xpose.msra.mxu0 %v254
        %557 = vmatprep.subr.mxu0 0.0
        %558 = vmatpush1.xpose.msra.mxu0 %v255
        %559 = vmatprep.subr.mxu0 0.0
        %560 = vmatpush1.xpose.msra.mxu0 %v256
        %561 = vmatprep.subr.mxu0 0.0
        %562 = vmatpush1.xpose.msra.mxu0 %v257
        %563 = vmatprep.subr.mxu0 0.0
        %564 = vmatpush1.xpose.msra.mxu0 %v258
        %565 = vmatprep.subr.mxu0 0.0
        %566 = vmatpush1.xpose.msra.mxu0 %v259
        %567 = vmatprep.subr.mxu0 0.0
        %568 = vmatpush1.xpose.msra.mxu0 %v260
        %569 = vmatprep.subr.mxu0 0.0
        %570 = vmatpush1.xpose.msra.mxu0 %v261
        %571 = vmatprep.subr.mxu0 0.0
        %572 = vmatpush1.xpose.msra.mxu0 %v262
        %573 = vmatprep.subr.mxu0 0.0
        %574 = vmatpush1.xpose.msra.mxu0 %v263
        %575 = vmatprep.subr.mxu0 0.0
        %576 = vmatpush1.xpose.msra.mxu0 %v264
        %577 = vmatprep.subr.mxu0 0.0
        %578 = vmatpush1.xpose.msra.mxu0 %v265
        %579 = vmatprep.subr.mxu0 0.0
        %580 = vmatpush1.xpose.msra.mxu0 %v266
        %581 = vmatprep.subr.mxu0 0.0
        %582 = vmatpush1.xpose.msra.mxu0 %v267
        %583 = vmatprep.subr.mxu0 0.0
        %584 = vmatpush1.xpose.msra.mxu0 %v268
        %585 = vmatprep.subr.mxu0 0.0
        %586 = vmatpush1.xpose.msra.mxu0 %v269
        %587 = vmatprep.subr.mxu0 0.0
        %588 = vmatpush1.xpose.msra.mxu0 %v270
        %589 = vmatprep.subr.mxu0 0.0
        %590 = vmatpush1.xpose.msra.mxu0 %v271
        %591 = vmatprep.subr.mxu0 0.0
        %592 = vmatpush1.xpose.msra.mxu0 %v272
        %593 = vmatprep.subr.mxu0 0.0
        %594 = vmatpush1.xpose.msra.mxu0 %v273
        %595 = vmatprep.subr.mxu0 0.0
        %596 = vmatpush1.xpose.msra.mxu0 %v274
        %597 = vmatprep.subr.mxu0 0.0
        %598 = vmatpush1.xpose.msra.mxu0 %v275
        %599 = vmatprep.subr.mxu0 0.0
        %600 = vmatpush1.xpose.msra.mxu0 %v276
        %601 = vmatprep.subr.mxu0 0.0
        %602 = vmatpush1.xpose.msra.mxu0 %v277
        %603 = vmatprep.subr.mxu0 0.0
        %604 = vmatpush1.xpose.msra.mxu0 %v278
        %605 = vmatprep.subr.mxu0 0.0
        %606 = vmatpush1.xpose.msra.mxu0 %v279
        %607 = vmatprep.mubr.f32.mxu0 0.0
        %608 = vmatmul.mubr.f32.gmra.mrb[0].mxu0 %v214
        %v609 = vpop.f32.mrb[0].mxu0
        %v610 = vadd.f32 0.0, %v609
        %v611 = vpop.f32.mrb[0].mxu0
        %v612 = vadd.f32 0.0, %v611
        %613 = vdwg.mxu0
        %614 = vmatprep.subr.mxu0 0.0
        %615 = vmatpush1.xpose.msra.mxu0 %v280
        %616 = vmatprep.subr.mxu0 0.0
        %617 = vmatpush1.xpose.msra.mxu0 %v281
        %618 = vmatprep.subr.mxu0 0.0
        %619 = vmatpush1.xpose.msra.mxu0 %v282
        %620 = vmatprep.subr.mxu0 0.0
        %621 = vmatpush1.xpose.msra.mxu0 %v283
        %622 = vmatprep.subr.mxu0 0.0
        %623 = vmatpush1.xpose.msra.mxu0 %v284
        %624 = vmatprep.subr.mxu0 0.0
        %625 = vmatpush1.xpose.msra.mxu0 %v285
        %626 = vmatprep.subr.mxu0 0.0
        %627 = vmatpush1.xpose.msra.mxu0 %v286
        %628 = vmatprep.subr.mxu0 0.0
        %629 = vmatpush1.xpose.msra.mxu0 %v287
        %630 = vmatprep.subr.mxu0 0.0
        %631 = vmatpush1.xpose.msra.mxu0 %v288
        %632 = vmatprep.subr.mxu0 0.0
        %633 = vmatpush1.xpose.msra.mxu0 %v289
        %634 = vmatprep.subr.mxu0 0.0
        %635 = vmatpush1.xpose.msra.mxu0 %v290
        %636 = vmatprep.subr.mxu0 0.0
        %637 = vmatpush1.xpose.msra.mxu0 %v291
        %638 = vmatprep.subr.mxu0 0.0
        %639 = vmatpush1.xpose.msra.mxu0 %v292
        %640 = vmatprep.subr.mxu0 0.0
        %641 = vmatpush1.xpose.msra.mxu0 %v293
        %642 = vmatprep.subr.mxu0 0.0
        %643 = vmatpush1.xpose.msra.mxu0 %v294
        %644 = vmatprep.subr.mxu0 0.0
        %645 = vmatpush1.xpose.msra.mxu0 %v295
        %646 = vmatprep.subr.mxu0 0.0
        %647 = vmatpush1.xpose.msra.mxu0 %v296
        %648 = vmatprep.subr.mxu0 0.0
        %649 = vmatpush1.xpose.msra.mxu0 %v297
        %650 = vmatprep.subr.mxu0 0.0
        %651 = vmatpush1.xpose.msra.mxu0 %v298
        %652 = vmatprep.subr.mxu0 0.0
        %653 = vmatpush1.xpose.msra.mxu0 %v299
        %654 = vmatprep.subr.mxu0 0.0
        %655 = vmatpush1.xpose.msra.mxu0 %v300
        %656 = vmatprep.subr.mxu0 0.0
        %657 = vmatpush1.xpose.msra.mxu0 %v301
        %658 = vmatprep.subr.mxu0 0.0
        %659 = vmatpush1.xpose.msra.mxu0 %v302
        %660 = vmatprep.subr.mxu0 0.0
        %661 = vmatpush1.xpose.msra.mxu0 %v303
        %662 = vmatprep.subr.mxu0 0.0
        %663 = vmatpush1.xpose.msra.mxu0 %v304
        %664 = vmatprep.subr.mxu0 0.0
        %665 = vmatpush1.xpose.msra.mxu0 %v305
        %666 = vmatprep.subr.mxu0 0.0
        %667 = vmatpush1.xpose.msra.mxu0 %v306
        %668 = vmatprep.subr.mxu0 0.0
        %669 = vmatpush1.xpose.msra.mxu0 %v307
        %670 = vmatprep.subr.mxu0 0.0
        %671 = vmatpush1.xpose.msra.mxu0 %v308
        %672 = vmatprep.subr.mxu0 0.0
        %673 = vmatpush1.xpose.msra.mxu0 %v309
        %674 = vmatprep.subr.mxu0 0.0
        %675 = vmatpush1.xpose.msra.mxu0 %v310
        %676 = vmatprep.subr.mxu0 0.0
        %677 = vmatpush1.xpose.msra.mxu0 %v311
        %678 = vmatprep.mubr.f32.mxu0 0.0
        %679 = vmatmul.mubr.f32.gmra.mrb[0].mxu0 %v214
        %v680 = vpop.f32.mrb[0].mxu0
        %v681 = vadd.f32 0.0, %v680
        %v682 = vpop.f32.mrb[0].mxu0
        %v683 = vadd.f32 0.0, %v682
        %684 = vdwg.mxu0
        %685 = vmatprep.subr.mxu0 0.0
        %686 = vmatpush1.xpose.msra.mxu0 %v312
        %687 = vmatprep.subr.mxu0 0.0
        %688 = vmatpush1.xpose.msra.mxu0 %v313
        %689 = vmatprep.subr.mxu0 0.0
        %690 = vmatpush1.xpose.msra.mxu0 %v314
        %691 = vmatprep.subr.mxu0 0.0
        %692 = vmatpush1.xpose.msra.mxu0 %v315
        %693 = vmatprep.subr.mxu0 0.0
        %694 = vmatpush1.xpose.msra.mxu0 %v316
        %695 = vmatprep.subr.mxu0 0.0
        %696 = vmatpush1.xpose.msra.mxu0 %v317
        %697 = vmatprep.subr.mxu0 0.0
        %698 = vmatpush1.xpose.msra.mxu0 %v318
        %699 = vmatprep.subr.mxu0 0.0
        %700 = vmatpush1.xpose.msra.mxu0 %v319
        %701 = vmatprep.subr.mxu0 0.0
        %702 = vmatpush1.xpose.msra.mxu0 %v320
        %703 = vmatprep.subr.mxu0 0.0
        %704 = vmatpush1.xpose.msra.mxu0 %v321
        %705 = vmatprep.subr.mxu0 0.0
        %706 = vmatpush1.xpose.msra.mxu0 %v322
        %707 = vmatprep.subr.mxu0 0.0
        %708 = vmatpush1.xpose.msra.mxu0 %v323
        %709 = vmatprep.subr.mxu0 0.0
        %710 = vmatpush1.xpose.msra.mxu0 %v324
        %711 = vmatprep.subr.mxu0 0.0
        %712 = vmatpush1.xpose.msra.mxu0 %v325
        %713 = vmatprep.subr.mxu0 0.0
        %714 = vmatpush1.xpose.msra.mxu0 %v326
        %715 = vmatprep.subr.mxu0 0.0
        %716 = vmatpush1.xpose.msra.mxu0 %v327
        %717 = vmatprep.subr.mxu0 0.0
        %718 = vmatpush1.xpose.msra.mxu0 %v328
        %719 = vmatprep.subr.mxu0 0.0
        %720 = vmatpush1.xpose.msra.mxu0 %v329
        %721 = vmatprep.subr.mxu0 0.0
        %722 = vmatpush1.xpose.msra.mxu0 %v330
        %723 = vmatprep.subr.mxu0 0.0
        %724 = vmatpush1.xpose.msra.mxu0 %v331
        %725 = vmatprep.subr.mxu0 0.0
        %726 = vmatpush1.xpose.msra.mxu0 %v332
        %727 = vmatprep.subr.mxu0 0.0
        %728 = vmatpush1.xpose.msra.mxu0 %v333
        %729 = vmatprep.subr.mxu0 0.0
        %730 = vmatpush1.xpose.msra.mxu0 %v334
        %731 = vmatprep.subr.mxu0 0.0
        %732 = vmatpush1.xpose.msra.mxu0 %v335
        %733 = vmatprep.subr.mxu0 0.0
        %734 = vmatpush1.xpose.msra.mxu0 %v336
        %735 = vmatprep.subr.mxu0 0.0
        %736 = vmatpush1.xpose.msra.mxu0 %v337
        %737 = vmatprep.subr.mxu0 0.0
        %738 = vmatpush1.xpose.msra.mxu0 %v338
        %739 = vmatprep.subr.mxu0 0.0
        %740 = vmatpush1.xpose.msra.mxu0 %v339
        %741 = vmatprep.subr.mxu0 0.0
        %742 = vmatpush1.xpose.msra.mxu0 %v340
        %743 = vmatprep.subr.mxu0 0.0
        %744 = vmatpush1.xpose.msra.mxu0 %v341
        %745 = vmatprep.subr.mxu0 0.0
        %746 = vmatpush1.xpose.msra.mxu0 %v342
        %747 = vmatprep.subr.mxu0 0.0
        %748 = vmatpush1.xpose.msra.mxu0 %v343
        %749 = vmatprep.mubr.f32.mxu0 0.0
        %750 = vmatmul.mubr.f32.gmra.mrb[0].mxu0 %v214
        %v751 = vpop.f32.mrb[0].mxu0
        %v752 = vadd.f32 0.0, %v751
        %v753 = vpop.f32.mrb[0].mxu0
        %v754 = vadd.f32 0.0, %v753
        %755 = vdwg.mxu0
        %756 = vmatprep.subr.mxu0 0.0
        %757 = vmatpush1.xpose.msra.mxu0 %v344
        %758 = vmatprep.subr.mxu0 0.0
        %759 = vmatpush1.xpose.msra.mxu0 %v345
        %760 = vmatprep.subr.mxu0 0.0
        %761 = vmatpush1.xpose.msra.mxu0 %v346
        %762 = vmatprep.subr.mxu0 0.0
        %763 = vmatpush1.xpose.msra.mxu0 %v347
        %764 = vmatprep.subr.mxu0 0.0
        %765 = vmatpush1.xpose.msra.mxu0 %v348
        %766 = vmatprep.subr.mxu0 0.0
        %767 = vmatpush1.xpose.msra.mxu0 %v349
        %768 = vmatprep.subr.mxu0 0.0
        %769 = vmatpush1.xpose.msra.mxu0 %v350
        %770 = vmatprep.subr.mxu0 0.0
        %771 = vmatpush1.xpose.msra.mxu0 %v351
        %772 = vmatprep.subr.mxu0 0.0
        %773 = vmatpush1.xpose.msra.mxu0 %v352
        %774 = vmatprep.subr.mxu0 0.0
        %775 = vmatpush1.xpose.msra.mxu0 %v353
        %776 = vmatprep.subr.mxu0 0.0
        %777 = vmatpush1.xpose.msra.mxu0 %v354
        %778 = vmatprep.subr.mxu0 0.0
        %779 = vmatpush1.xpose.msra.mxu0 %v355
        %780 = vmatprep.subr.mxu0 0.0
        %781 = vmatpush1.xpose.msra.mxu0 %v356
        %782 = vmatprep.subr.mxu0 0.0
        %783 = vmatpush1.xpose.msra.mxu0 %v357
        %784 = vmatprep.subr.mxu0 0.0
        %785 = vmatpush1.xpose.msra.mxu0 %v358
        %786 = vmatprep.subr.mxu0 0.0
        %787 = vmatpush1.xpose.msra.mxu0 %v359
        %788 = vmatprep.subr.mxu0 0.0
        %789 = vmatpush1.xpose.msra.mxu0 %v360
        %790 = vmatprep.subr.mxu0 0.0
        %791 = vmatpush1.xpose.msra.mxu0 %v361
        %792 = vmatprep.subr.mxu0 0.0
        %793 = vmatpush1.xpose.msra.mxu0 %v362
        %794 = vmatprep.subr.mxu0 0.0
        %795 = vmatpush1.xpose.msra.mxu0 %v363
        %796 = vmatprep.subr.mxu0 0.0
        %797 = vmatpush1.xpose.msra.mxu0 %v364
        %798 = vmatprep.subr.mxu0 0.0
        %799 = vmatpush1.xpose.msra.mxu0 %v365
        %800 = vmatprep.subr.mxu0 0.0
        %801 = vmatpush1.xpose.msra.mxu0 %v366
        %802 = vmatprep.subr.mxu0 0.0
        %803 = vmatpush1.xpose.msra.mxu0 %v367
        %804 = vmatprep.subr.mxu0 0.0
        %805 = vmatpush1.xpose.msra.mxu0 %v368
        %806 = vmatprep.subr.mxu0 0.0
        %807 = vmatpush1.xpose.msra.mxu0 %v369
        %808 = vmatprep.subr.mxu0 0.0
        %809 = vmatpush1.xpose.msra.mxu0 %v370
        %810 = vmatprep.subr.mxu0 0.0
        %811 = vmatpush1.xpose.msra.mxu0 %v371
        %812 = vmatprep.subr.mxu0 0.0
        %813 = vmatpush1.xpose.msra.mxu0 %v372
        %814 = vmatprep.subr.mxu0 0.0
        %815 = vmatpush1.xpose.msra.mxu0 %v373
        %816 = vmatprep.subr.mxu0 0.0
        %817 = vmatpush1.xpose.msra.mxu0 %v374
        %818 = vmatprep.subr.mxu0 0.0
        %819 = vmatpush1.xpose.msra.mxu0 %v375
        %820 = vmatprep.mubr.f32.mxu0 0.0
        %821 = vmatmul.mubr.f32.gmra.mrb[0].mxu0 %v214
        %v822 = vpop.f32.mrb[0].mxu0
        %v823 = vadd.f32 0.0, %v822
        %v824 = vpop.f32.mrb[0].mxu0
        %v825 = vadd.f32 0.0, %v824
        %826 = vdwg.mxu0
        %827 = vmatprep.subr.mxu0 0.0
        %828 = vmatpush1.xpose.msra.mxu0 %v376
        %829 = vmatprep.subr.mxu0 0.0
        %830 = vmatpush1.xpose.msra.mxu0 %v377
        %831 = vmatprep.subr.mxu0 0.0
        %832 = vmatpush1.xpose.msra.mxu0 %v378
        %833 = vmatprep.subr.mxu0 0.0
        %834 = vmatpush1.xpose.msra.mxu0 %v379
        %835 = vmatprep.subr.mxu0 0.0
        %836 = vmatpush1.xpose.msra.mxu0 %v380
        %837 = vmatprep.subr.mxu0 0.0
        %838 = vmatpush1.xpose.msra.mxu0 %v381
        %839 = vmatprep.subr.mxu0 0.0
        %840 = vmatpush1.xpose.msra.mxu0 %v382
        %841 = vmatprep.subr.mxu0 0.0
        %842 = vmatpush1.xpose.msra.mxu0 %v383
        %843 = vmatprep.subr.mxu0 0.0
        %844 = vmatpush1.xpose.msra.mxu0 %v384
        %845 = vmatprep.subr.mxu0 0.0
        %846 = vmatpush1.xpose.msra.mxu0 %v385
        %847 = vmatprep.subr.mxu0 0.0
        %848 = vmatpush1.xpose.msra.mxu0 %v386
        %849 = vmatprep.subr.mxu0 0.0
        %850 = vmatpush1.xpose.msra.mxu0 %v387
        %851 = vmatprep.subr.mxu0 0.0
        %852 = vmatpush1.xpose.msra.mxu0 %v388
        %853 = vmatprep.subr.mxu0 0.0
        %854 = vmatpush1.xpose.msra.mxu0 %v389
        %855 = vmatprep.subr.mxu0 0.0
        %856 = vmatpush1.xpose.msra.mxu0 %v390
        %857 = vmatprep.subr.mxu0 0.0
        %858 = vmatpush1.xpose.msra.mxu0 %v391
        %859 = vmatprep.subr.mxu0 0.0
        %860 = vmatpush1.xpose.msra.mxu0 %v392
        %861 = vmatprep.subr.mxu0 0.0
        %862 = vmatpush1.xpose.msra.mxu0 %v393
        %863 = vmatprep.subr.mxu0 0.0
        %864 = vmatpush1.xpose.msra.mxu0 %v394
        %865 = vmatprep.subr.mxu0 0.0
        %866 = vmatpush1.xpose.msra.mxu0 %v395
        %867 = vmatprep.subr.mxu0 0.0
        %868 = vmatpush1.xpose.msra.mxu0 %v396
        %869 = vmatprep.subr.mxu0 0.0
        %870 = vmatpush1.xpose.msra.mxu0 %v397
        %871 = vmatprep.subr.mxu0 0.0
        %872 = vmatpush1.xpose.msra.mxu0 %v398
        %873 = vmatprep.subr.mxu0 0.0
        %874 = vmatpush1.xpose.msra.mxu0 %v399
        %875 = vmatprep.subr.mxu0 0.0
        %876 = vmatpush1.xpose.msra.mxu0 %v400
        %877 = vmatprep.subr.mxu0 0.0
        %878 = vmatpush1.xpose.msra.mxu0 %v401
        %879 = vmatprep.subr.mxu0 0.0
        %880 = vmatpush1.xpose.msra.mxu0 %v402
        %881 = vmatprep.subr.mxu0 0.0
        %882 = vmatpush1.xpose.msra.mxu0 %v403
        %883 = vmatprep.subr.mxu0 0.0
        %884 = vmatpush1.xpose.msra.mxu0 %v404
        %885 = vmatprep.subr.mxu0 0.0
        %886 = vmatpush1.xpose.msra.mxu0 %v405
        %887 = vmatprep.subr.mxu0 0.0
        %888 = vmatpush1.xpose.msra.mxu0 %v406
        %889 = vmatprep.subr.mxu0 0.0
        %890 = vmatpush1.xpose.msra.mxu0 %v407
        %891 = vmatprep.mubr.f32.mxu0 0.0
        %892 = vmatmul.mubr.f32.gmra.mrb[0].mxu0 %v214
        %v893 = vpop.f32.mrb[0].mxu0
        %v894 = vadd.f32 0.0, %v893
        %v895 = vpop.f32.mrb[0].mxu0
        %v896 = vadd.f32 0.0, %v895
        %897 = vdwg.mxu0
        %898 = vmatprep.subr.mxu0 0.0
        %899 = vmatpush1.xpose.msra.mxu0 %v408
        %900 = vmatprep.subr.mxu0 0.0
        %901 = vmatpush1.xpose.msra.mxu0 %v409
        %902 = vmatprep.subr.mxu0 0.0
        %903 = vmatpush1.xpose.msra.mxu0 %v410
        %904 = vmatprep.subr.mxu0 0.0
        %905 = vmatpush1.xpose.msra.mxu0 %v411
        %906 = vmatprep.subr.mxu0 0.0
        %907 = vmatpush1.xpose.msra.mxu0 %v412
        %908 = vmatprep.subr.mxu0 0.0
        %909 = vmatpush1.xpose.msra.mxu0 %v413
        %910 = vmatprep.subr.mxu0 0.0
        %911 = vmatpush1.xpose.msra.mxu0 %v414
        %912 = vmatprep.subr.mxu0 0.0
        %913 = vmatpush1.xpose.msra.mxu0 %v415
        %914 = vmatprep.subr.mxu0 0.0
        %915 = vmatpush1.xpose.msra.mxu0 %v416
        %916 = vmatprep.subr.mxu0 0.0
        %917 = vmatpush1.xpose.msra.mxu0 %v417
        %918 = vmatprep.subr.mxu0 0.0
        %919 = vmatpush1.xpose.msra.mxu0 %v418
        %920 = vmatprep.subr.mxu0 0.0
        %921 = vmatpush1.xpose.msra.mxu0 %v419
        %922 = vmatprep.subr.mxu0 0.0
        %923 = vmatpush1.xpose.msra.mxu0 %v420
        %924 = vmatprep.subr.mxu0 0.0
        %925 = vmatpush1.xpose.msra.mxu0 %v421
        %926 = vmatprep.subr.mxu0 0.0
        %927 = vmatpush1.xpose.msra.mxu0 %v422
        %928 = vmatprep.subr.mxu0 0.0
        %929 = vmatpush1.xpose.msra.mxu0 %v423
        %930 = vmatprep.subr.mxu0 0.0
        %931 = vmatpush1.xpose.msra.mxu0 %v424
        %932 = vmatprep.subr.mxu0 0.0
        %933 = vmatpush1.xpose.msra.mxu0 %v425
        %934 = vmatprep.subr.mxu0 0.0
        %935 = vmatpush1.xpose.msra.mxu0 %v426
        %936 = vmatprep.subr.mxu0 0.0
        %937 = vmatpush1.xpose.msra.mxu0 %v427
        %938 = vmatprep.subr.mxu0 0.0
        %939 = vmatpush1.xpose.msra.mxu0 %v428
        %940 = vmatprep.subr.mxu0 0.0
        %941 = vmatpush1.xpose.msra.mxu0 %v429
        %942 = vmatprep.subr.mxu0 0.0
        %943 = vmatpush1.xpose.msra.mxu0 %v430
        %944 = vmatprep.subr.mxu0 0.0
        %945 = vmatpush1.xpose.msra.mxu0 %v431
        %946 = vmatprep.subr.mxu0 0.0
        %947 = vmatpush1.xpose.msra.mxu0 %v432
        %948 = vmatprep.subr.mxu0 0.0
        %949 = vmatpush1.xpose.msra.mxu0 %v433
        %950 = vmatprep.subr.mxu0 0.0
        %951 = vmatpush1.xpose.msra.mxu0 %v434
        %952 = vmatprep.subr.mxu0 0.0
        %953 = vmatpush1.xpose.msra.mxu0 %v435
        %954 = vmatprep.subr.mxu0 0.0
        %955 = vmatpush1.xpose.msra.mxu0 %v436
        %956 = vmatprep.subr.mxu0 0.0
        %957 = vmatpush1.xpose.msra.mxu0 %v437
        %958 = vmatprep.subr.mxu0 0.0
        %959 = vmatpush1.xpose.msra.mxu0 %v438
        %960 = vmatprep.subr.mxu0 0.0
        %961 = vmatpush1.xpose.msra.mxu0 %v439
        %962 = vmatprep.mubr.f32.mxu0 0.0
        %963 = vmatmul.mubr.f32.gmra.mrb[0].mxu0 %v214
        %v964 = vpop.f32.mrb[0].mxu0
        %v965 = vadd.f32 0.0, %v964
        %v966 = vpop.f32.mrb[0].mxu0
        %v967 = vadd.f32 0.0, %v966
        %968 = vdwg.mxu0
        %969 = vmatprep.subr.mxu0 0.0
        %970 = vmatpush1.xpose.msra.mxu0 %v440
        %971 = vmatprep.subr.mxu0 0.0
        %972 = vmatpush1.xpose.msra.mxu0 %v441
        %973 = vmatprep.subr.mxu0 0.0
        %974 = vmatpush1.xpose.msra.mxu0 %v442
        %975 = vmatprep.subr.mxu0 0.0
        %976 = vmatpush1.xpose.msra.mxu0 %v443
        %977 = vmatprep.subr.mxu0 0.0
        %978 = vmatpush1.xpose.msra.mxu0 %v444
        %979 = vmatprep.subr.mxu0 0.0
        %980 = vmatpush1.xpose.msra.mxu0 %v445
        %981 = vmatprep.subr.mxu0 0.0
        %982 = vmatpush1.xpose.msra.mxu0 %v446
        %983 = vmatprep.subr.mxu0 0.0
        %984 = vmatpush1.xpose.msra.mxu0 %v447
        %985 = vmatprep.subr.mxu0 0.0
        %986 = vmatpush1.xpose.msra.mxu0 %v448
        %987 = vmatprep.subr.mxu0 0.0
        %988 = vmatpush1.xpose.msra.mxu0 %v449
        %989 = vmatprep.subr.mxu0 0.0
        %990 = vmatpush1.xpose.msra.mxu0 %v450
        %991 = vmatprep.subr.mxu0 0.0
        %992 = vmatpush1.xpose.msra.mxu0 %v451
        %993 = vmatprep.subr.mxu0 0.0
        %994 = vmatpush1.xpose.msra.mxu0 %v452
        %995 = vmatprep.subr.mxu0 0.0
        %996 = vmatpush1.xpose.msra.mxu0 %v453
        %997 = vmatprep.subr.mxu0 0.0
        %998 = vmatpush1.xpose.msra.mxu0 %v454
        %999 = vmatprep.subr.mxu0 0.0
        %1000 = vmatpush1.xpose.msra.mxu0 %v455
        %1001 = vmatprep.subr.mxu0 0.0
        %1002 = vmatpush1.xpose.msra.mxu0 %v456
        %1003 = vmatprep.subr.mxu0 0.0
        %1004 = vmatpush1.xpose.msra.mxu0 %v457
        %1005 = vmatprep.subr.mxu0 0.0
        %1006 = vmatpush1.xpose.msra.mxu0 %v458
        %1007 = vmatprep.subr.mxu0 0.0
        %1008 = vmatpush1.xpose.msra.mxu0 %v459
        %1009 = vmatprep.subr.mxu0 0.0
        %1010 = vmatpush1.xpose.msra.mxu0 %v460
        %1011 = vmatprep.subr.mxu0 0.0
        %1012 = vmatpush1.xpose.msra.mxu0 %v461
        %1013 = vmatprep.subr.mxu0 0.0
        %1014 = vmatpush1.xpose.msra.mxu0 %v462
        %1015 = vmatprep.subr.mxu0 0.0
        %1016 = vmatpush1.xpose.msra.mxu0 %v463
        %1017 = vmatprep.subr.mxu0 0.0
        %1018 = vmatpush1.xpose.msra.mxu0 %v464
        %1019 = vmatprep.subr.mxu0 0.0
        %1020 = vmatpush1.xpose.msra.mxu0 %v465
        %1021 = vmatprep.subr.mxu0 0.0
        %1022 = vmatpush1.xpose.msra.mxu0 %v466
        %1023 = vmatprep.subr.mxu0 0.0
        %1024 = vmatpush1.xpose.msra.mxu0 %v467
        %1025 = vmatprep.subr.mxu0 0.0
        %1026 = vmatpush1.xpose.msra.mxu0 %v468
        %1027 = vmatprep.subr.mxu0 0.0
        %1028 = vmatpush1.xpose.msra.mxu0 %v469
        %1029 = vmatprep.subr.mxu0 0.0
        %1030 = vmatpush1.xpose.msra.mxu0 %v470
        %1031 = vmatprep.subr.mxu0 0.0
        %1032 = vmatpush1.xpose.msra.mxu0 %v471
        %1033 = vmatprep.mubr.f32.mxu0 0.0
        %1034 = vmatmul.mubr.f32.gmra.mrb[0].mxu0 %v214
        %v1035 = vpop.f32.mrb[0].mxu0
        %v1036 = vadd.f32 0.0, %v1035
        %v1037 = vpop.f32.mrb[0].mxu0
        %v1038 = vadd.f32 0.0, %v1037
        %1039 = vdwg.mxu0
        %v1040 = vstv %s215
        %v1041 = vadd.f32 %v539, %v1040
        %v1042 = vadd.f32 %v541, %v1040
        %v1043 = vadd.f32 %v610, %v1040
        %v1044 = vadd.f32 %v612, %v1040
        %v1045 = vadd.f32 %v681, %v1040
        %v1046 = vadd.f32 %v683, %v1040
        %v1047 = vadd.f32 %v752, %v1040
        %v1048 = vadd.f32 %v754, %v1040
        %v1049 = vadd.f32 %v823, %v1040
        %v1050 = vadd.f32 %v825, %v1040
        %v1051 = vadd.f32 %v894, %v1040
        %v1052 = vadd.f32 %v896, %v1040
        %v1053 = vadd.f32 %v965, %v1040
        %v1054 = vadd.f32 %v967, %v1040
        %v1055 = vadd.f32 %v1036, %v1040
        %v1056 = vadd.f32 %v1038, %v1040
        %v1057 = vsub.f32 0.0, %v1041
        %v1058 = vsub.f32 0.0, %v1042
        %v1059 = vsub.f32 0.0, %v1043
        %v1060 = vsub.f32 0.0, %v1044
        %v1061 = vsub.f32 0.0, %v1045
        %v1062 = vsub.f32 0.0, %v1046
        %v1063 = vsub.f32 0.0, %v1047
        %v1064 = vsub.f32 0.0, %v1048
        %v1065 = vsub.f32 0.0, %v1049
        %v1066 = vsub.f32 0.0, %v1050
        %v1067 = vsub.f32 0.0, %v1051
        %v1068 = vsub.f32 0.0, %v1052
        %v1069 = vsub.f32 0.0, %v1053
        %v1070 = vsub.f32 0.0, %v1054
        %v1071 = vsub.f32 0.0, %v1055
        %v1072 = vsub.f32 0.0, %v1056
        %v1073 = vmul.f32 %v1057, 1.442695
        %v1074 = vpow.pop %v1073
        %v1075 = vmul.f32 %v1058, 1.442695
        %v1076 = vpow.pop %v1075
        %v1077 = vmul.f32 %v1059, 1.442695
        %v1078 = vpow.pop %v1077
        %v1079 = vmul.f32 %v1060, 1.442695
        %v1080 = vpow.pop %v1079
        %v1081 = vmul.f32 %v1061, 1.442695
        %v1082 = vpow.pop %v1081
        %v1083 = vmul.f32 %v1062, 1.442695
        %v1084 = vpow.pop %v1083
        %v1085 = vmul.f32 %v1063, 1.442695
        %v1086 = vpow.pop %v1085
        %v1087 = vmul.f32 %v1064, 1.442695
        %v1088 = vpow.pop %v1087
        %v1089 = vmul.f32 %v1065, 1.442695
        %v1090 = vpow.pop %v1089
        %v1091 = vmul.f32 %v1066, 1.442695
        %v1092 = vpow.pop %v1091
        %v1093 = vmul.f32 %v1067, 1.442695
        %v1094 = vpow.pop %v1093
        %v1095 = vmul.f32 %v1068, 1.442695
        %v1096 = vpow.pop %v1095
        %v1097 = vmul.f32 %v1069, 1.442695
        %v1098 = vpow.pop %v1097
        %v1099 = vmul.f32 %v1070, 1.442695
        %v1100 = vpow.pop %v1099
        %v1101 = vmul.f32 %v1071, 1.442695
        %v1102 = vpow.pop %v1101
        %v1103 = vmul.f32 %v1072, 1.442695
        %v1104 = vpow.pop %v1103
        %v1105 = vadd.f32 %v1074, 1.0
        %v1106 = vadd.f32 %v1076, 1.0
        %v1107 = vadd.f32 %v1078, 1.0
        %v1108 = vadd.f32 %v1080, 1.0
        %v1109 = vadd.f32 %v1082, 1.0
        %v1110 = vadd.f32 %v1084, 1.0
        %v1111 = vadd.f32 %v1086, 1.0
        %v1112 = vadd.f32 %v1088, 1.0
        %v1113 = vadd.f32 %v1090, 1.0
        %v1114 = vadd.f32 %v1092, 1.0
        %v1115 = vadd.f32 %v1094, 1.0
        %v1116 = vadd.f32 %v1096, 1.0
        %v1117 = vadd.f32 %v1098, 1.0
        %v1118 = vadd.f32 %v1100, 1.0
        %v1119 = vadd.f32 %v1102, 1.0
        %v1120 = vadd.f32 %v1104, 1.0
        %v1121 = vrcp.pop %v1105
        %v1122 = vmul.f32 1.0, %v1121
        %v1123 = vrcp.pop %v1106
        %v1124 = vmul.f32 1.0, %v1123
        %v1125 = vrcp.pop %v1107
        %v1126 = vmul.f32 1.0, %v1125
        %v1127 = vrcp.pop %v1108
        %v1128 = vmul.f32 1.0, %v1127
        %v1129 = vrcp.pop %v1109
        %v1130 = vmul.f32 1.0, %v1129
        %v1131 = vrcp.pop %v1110
        %v1132 = vmul.f32 1.0, %v1131
        %v1133 = vrcp.pop %v1111
        %v1134 = vmul.f32 1.0, %v1133
        %v1135 = vrcp.pop %v1112
        %v1136 = vmul.f32 1.0, %v1135
        %v1137 = vrcp.pop %v1113
        %v1138 = vmul.f32 1.0, %v1137
        %v1139 = vrcp.pop %v1114
        %v1140 = vmul.f32 1.0, %v1139
        %v1141 = vrcp.pop %v1115
        %v1142 = vmul.f32 1.0, %v1141
        %v1143 = vrcp.pop %v1116
        %v1144 = vmul.f32 1.0, %v1143
        %v1145 = vrcp.pop %v1117
        %v1146 = vmul.f32 1.0, %v1145
        %v1147 = vrcp.pop %v1118
        %v1148 = vmul.f32 1.0, %v1147
        %v1149 = vrcp.pop %v1119
        %v1150 = vmul.f32 1.0, %v1149
        %v1151 = vrcp.pop %v1120
        %v1152 = vmul.f32 1.0, %v1151
        %v1169 = vcombine.low %v1122, %v1124
        %v1170 = vcombine.low %v1126, %v1128
        %v1171 = vcombine.low %v1130, %v1132
        %v1172 = vcombine.low %v1134, %v1136
        %v1174 = vunpack.c.l.s4 1966171168
        %v1175 = vunpack.c.0.s8 %v1174
        %v1176 = vlaneseq
        %v1177 = vshrl.u32 %v1176, 7
        %v1178 = vsub.s32 %v1175, %v1177
        %v1179 = vrot.slane %v1169, %v1178
        %v1181 = vunpack.c.l.s4 1966171168
        %v1182 = vunpack.c.0.s8 %v1181
        %v1183 = vlaneseq
        %v1184 = vshrl.u32 %v1183, 7
        %v1185 = vsub.s32 %v1182, %v1184
        %v1186 = vrot.slane %v1170, %v1185
        %v1188 = vunpack.c.l.s4 1966171168
        %v1189 = vunpack.c.0.s8 %v1188
        %v1190 = vlaneseq
        %v1191 = vshrl.u32 %v1190, 7
        %v1192 = vsub.s32 %v1189, %v1191
        %v1193 = vrot.slane %v1171, %v1192
        %v1195 = vunpack.c.l.s4 1966171168
        %v1196 = vunpack.c.0.s8 %v1195
        %v1197 = vlaneseq
        %v1198 = vshrl.u32 %v1197, 7
        %v1199 = vsub.s32 %v1196, %v1198
        %v1200 = vrot.slane %v1172, %v1199
        %v1201 = vcombine.low %v1179, %v1186
        %v1202 = vcombine.low %v1193, %v1200
        %v1204 = vunpack.c.l.s4 1966171168
        %v1205 = vunpack.c.0.s8 %v1204
        %v1206 = vlaneseq
        %v1207 = vshrl.u32 %v1206, 7
        %v1208 = vsub.s32 %v1205, %v1207
        %v1209 = vrot.slane %v1201, %v1208
        %v1211 = vunpack.c.l.s4 1966171168
        %v1212 = vunpack.c.0.s8 %v1211
        %v1213 = vlaneseq
        %v1214 = vshrl.u32 %v1213, 7
        %v1215 = vsub.s32 %v1212, %v1214
        %v1216 = vrot.slane %v1202, %v1215
        %v1217 = vcombine.low %v1209, %v1216
        %v1218 = vcombine.low %v1138, %v1140
        %v1219 = vcombine.low %v1142, %v1144
        %v1220 = vcombine.low %v1146, %v1148
        %v1221 = vcombine.low %v1150, %v1152
        %v1223 = vunpack.c.l.s4 1966171168
        %v1224 = vunpack.c.0.s8 %v1223
        %v1225 = vlaneseq
        %v1226 = vshrl.u32 %v1225, 7
        %v1227 = vsub.s32 %v1224, %v1226
        %v1228 = vrot.slane %v1218, %v1227
        %v1230 = vunpack.c.l.s4 1966171168
        %v1231 = vunpack.c.0.s8 %v1230
        %v1232 = vlaneseq
        %v1233 = vshrl.u32 %v1232, 7
        %v1234 = vsub.s32 %v1231, %v1233
        %v1235 = vrot.slane %v1219, %v1234
        %v1237 = vunpack.c.l.s4 1966171168
        %v1238 = vunpack.c.0.s8 %v1237
        %v1239 = vlaneseq
        %v1240 = vshrl.u32 %v1239, 7
        %v1241 = vsub.s32 %v1238, %v1240
        %v1242 = vrot.slane %v1220, %v1241
        %v1244 = vunpack.c.l.s4 1966171168
        %v1245 = vunpack.c.0.s8 %v1244
        %v1246 = vlaneseq
        %v1247 = vshrl.u32 %v1246, 7
        %v1248 = vsub.s32 %v1245, %v1247
        %v1249 = vrot.slane %v1221, %v1248
        %v1250 = vcombine.low %v1228, %v1235
        %v1251 = vcombine.low %v1242, %v1249
        %v1253 = vunpack.c.l.s4 1966171168
        %v1254 = vunpack.c.0.s8 %v1253
        %v1255 = vlaneseq
        %v1256 = vshrl.u32 %v1255, 7
        %v1257 = vsub.s32 %v1254, %v1256
        %v1258 = vrot.slane %v1250, %v1257
        %v1260 = vunpack.c.l.s4 1966171168
        %v1261 = vunpack.c.0.s8 %v1260
        %v1262 = vlaneseq
        %v1263 = vshrl.u32 %v1262, 7
        %v1264 = vsub.s32 %v1261, %v1263
        %v1265 = vrot.slane %v1251, %v1264
        %v1266 = vcombine.low %v1258, %v1265
        %1269 = vst [vmem:[%s208] sm:$0xff] %v1217
        %1270 = vst [vmem:[%s208 + $0x8] sm:$0xff] %v1266
        %v1271 = vld [vmem:[%s182 + $0x800] sm:$0xff]
        %v1272 = vld [vmem:[%s182 + $0x808] sm:$0xff]
        %v1273 = vld [vmem:[%s182 + $0x810] sm:$0xff]
        %v1274 = vld [vmem:[%s182 + $0x818] sm:$0xff]
        %v1275 = vld [vmem:[%s182 + $0x820] sm:$0xff]
        %v1276 = vld [vmem:[%s182 + $0x828] sm:$0xff]
        %v1277 = vld [vmem:[%s182 + $0x830] sm:$0xff]
        %v1278 = vld [vmem:[%s182 + $0x838] sm:$0xff]
        %v1279 = vld [vmem:[%s182 + $0x840] sm:$0xff]
        %v1280 = vld [vmem:[%s182 + $0x848] sm:$0xff]
        %v1281 = vld [vmem:[%s182 + $0x850] sm:$0xff]
        %v1282 = vld [vmem:[%s182 + $0x858] sm:$0xff]
        %v1283 = vld [vmem:[%s182 + $0x860] sm:$0xff]
        %v1284 = vld [vmem:[%s182 + $0x868] sm:$0xff]
        %v1285 = vld [vmem:[%s182 + $0x870] sm:$0xff]
        %v1286 = vld [vmem:[%s182 + $0x878] sm:$0xff]
        %1287 = vmatprep.subr.mxu0 0.0
        %1288 = vmatpush1.xpose.msra.mxu0 %v1271
        %1289 = vmatprep.subr.mxu0 0.0
        %1290 = vmatpush1.xpose.msra.mxu0 %v1272
        %1291 = vmatprep.subr.mxu0 0.0
        %1292 = vmatpush1.xpose.msra.mxu0 %v1273
        %1293 = vmatprep.subr.mxu0 0.0
        %1294 = vmatpush1.xpose.msra.mxu0 %v1274
        %1295 = vmatprep.subr.mxu0 0.0
        %1296 = vmatpush1.xpose.msra.mxu0 %v1275
        %1297 = vmatprep.subr.mxu0 0.0
        %1298 = vmatpush1.xpose.msra.mxu0 %v1276
        %1299 = vmatprep.subr.mxu0 0.0
        %1300 = vmatpush1.xpose.msra.mxu0 %v1277
        %1301 = vmatprep.subr.mxu0 0.0
        %1302 = vmatpush1.xpose.msra.mxu0 %v1278
        %1303 = vmatprep.subr.mxu0 0.0
        %1304 = vmatpush1.xpose.msra.mxu0 %v1279
        %1305 = vmatprep.subr.mxu0 0.0
        %1306 = vmatpush1.xpose.msra.mxu0 %v1280
        %1307 = vmatprep.subr.mxu0 0.0
        %1308 = vmatpush1.xpose.msra.mxu0 %v1281
        %1309 = vmatprep.subr.mxu0 0.0
        %1310 = vmatpush1.xpose.msra.mxu0 %v1282
        %1311 = vmatprep.subr.mxu0 0.0
        %1312 = vmatpush1.xpose.msra.mxu0 %v1283
        %1313 = vmatprep.subr.mxu0 0.0
        %1314 = vmatpush1.xpose.msra.mxu0 %v1284
        %1315 = vmatprep.subr.mxu0 0.0
        %1316 = vmatpush1.xpose.msra.mxu0 %v1285
        %1317 = vmatprep.subr.mxu0 0.0
        %1318 = vmatpush1.xpose.msra.mxu0 %v1286
        %1319 = vmatprep.subr.mxu0 0.0
        %1320 = vmatpush1.xpose.msra.mxu0 0.0
        %1321 = vmatprep.subr.mxu0 0.0
        %1322 = vmatpush1.xpose.msra.mxu0 0.0
        %1323 = vmatprep.subr.mxu0 0.0
        %1324 = vmatpush1.xpose.msra.mxu0 0.0
        %1325 = vmatprep.subr.mxu0 0.0
        %1326 = vmatpush1.xpose.msra.mxu0 0.0
        %1327 = vmatprep.subr.mxu0 0.0
        %1328 = vmatpush1.xpose.msra.mxu0 0.0
        %1329 = vmatprep.subr.mxu0 0.0
        %1330 = vmatpush1.xpose.msra.mxu0 0.0
        %1331 = vmatprep.subr.mxu0 0.0
        %1332 = vmatpush1.xpose.msra.mxu0 0.0
        %1333 = vmatprep.subr.mxu0 0.0
        %1334 = vmatpush1.xpose.msra.mxu0 0.0
        %1335 = vmatprep.subr.mxu0 0.0
        %1336 = vmatpush1.xpose.msra.mxu0 0.0
        %1337 = vmatprep.subr.mxu0 0.0
        %1338 = vmatpush1.xpose.msra.mxu0 0.0
        %1339 = vmatprep.subr.mxu0 0.0
        %1340 = vmatpush1.xpose.msra.mxu0 0.0
        %1341 = vmatprep.subr.mxu0 0.0
        %1342 = vmatpush1.xpose.msra.mxu0 0.0
        %1343 = vmatprep.subr.mxu0 0.0
        %1344 = vmatpush1.xpose.msra.mxu0 0.0
        %1345 = vmatprep.subr.mxu0 0.0
        %1346 = vmatpush1.xpose.msra.mxu0 0.0
        %1347 = vmatprep.subr.mxu0 0.0
        %1348 = vmatpush1.xpose.msra.mxu0 0.0
        %1349 = vmatprep.subr.mxu0 0.0
        %1350 = vmatpush1.xpose.msra.mxu0 0.0
        %1351 = vmatprep.mubr.f32.mxu0 0.0
        %1352 = vmatmul.mubr.f32.gmra.mrb[0].mxu0 %v214
        %v1353 = vpop.f32.mrb[0].mxu0
        %v1354 = vadd.f32 0.0, %v1353
        %v1355 = vpop.f32.mrb[0].mxu0
        %1356 = vdwg.mxu0
        %v1357 = vadd.f32 %v1354, %v1040
        %v1358 = vsub.f32 0.0, %v1357
        %v1359 = vmul.f32 %v1358, 1.442695
        %v1360 = vpow.pop %v1359
        %v1361 = vadd.f32 %v1360, 1.0
        %v1362 = vrcp.pop %v1361
        %v1363 = vmul.f32 1.0, %v1362
        %v1364 = vlaneseq
        %vm1365 = vcmp.ge.s32.totalorder %v1364, 0
        %vm1366 = vcmp.lt.s32.totalorder %v1364, 128
        %vm1367 = vmand %vm1365, %vm1366
        %1368 = vst.msk [vmem:[%s208 + $0x10] sm:$0x1] %vm1367, %v1363
        %s1369 = sand.u32 %s98, 1
        %s1370 = scalar_lea.sflag [#allocation5], %s1369
        %s1371 = sand.u32 %s98, 1
        %s1372 = smul.addr %s1371, 17
        %s1373 = scalar_lea.vmem [#allocation8], %s1372
        // Predicated region
        $region41: #{tpu_custom_call.1} parent=31 // pred_check
          %p1374 = pneg %p108
        $region42: #{tpu_custom_call.1} parent=31 // pred_check_branch
          %1376 = sbr.rel (%p1374) target = $region44
        $region43: #{tpu_custom_call.1} parent=31 // pred_region
          %s1378 = ssub.s32 272, 272
          %1379 = vsyncadd %s1370, %s1378
          %s1380 = smul.addr %s22, 17
          %s1381 = smul.addr %s1380, 16
          %s1382 = scalar_lea.hbm %s3, %s1381
          %s1384 = sshll.u32 %s1373, 4
          %s1385 = int_to_ptr.vmem [resolvable:$true] %s1384
          %1387 = dma.vmem_to_hbm [thread:$0]  %s1385, 272, %s1382, %s1370
        $region44: #{tpu_custom_call.1} parent=31 // pred_fallthru
          _
      $region32: #{tpu_custom_call.1} parent=5 // pred_fallthru
        _
      %p1388 = scmp.le.s32.totalorder 2, %s17
      // Predicated region
      $region45: #{tpu_custom_call.1} parent=5 // pred_check
        %p1389 = pneg %p1388
      $region46: #{tpu_custom_call.1} parent=5 // pred_check_branch
        %1391 = sbr.rel (%p1389) target = $region48
      $region47: #{tpu_custom_call.1} parent=5 // pred_region
        %s1392 = ssub.s32 %s17, 2
        // Predicated region
        $region49: #{tpu_custom_call.1} parent=47 // pred_check
          %p1393 = pneg %p114
        $region50: #{tpu_custom_call.1} parent=47 // pred_check_branch
          %1395 = sbr.rel (%p1393) target = $region52
        $region51: #{tpu_custom_call.1} parent=47 // pred_region
          %s1396 = sand.u32 %s99, 1
          %s1397 = scalar_lea.sflag [#allocation5], %s1396
          %s1398 = sand.u32 %s99, 1
          %s1399 = smul.addr %s1398, 17
          %s1400 = scalar_lea.vmem [#allocation8], %s1399
          %1401 = dma.done %s1397, 272
        $region52: #{tpu_custom_call.1} parent=47 // pred_fallthru
          _
      $region48: #{tpu_custom_call.1} parent=5 // pred_fallthru
        _
    $region6: #{tpu_custom_call.1} parent=1 // loop_footer
      %s21 = sadd.s32 1, %s17
    $region7: #{tpu_custom_call.1} parent=1 // loop_footer_branch
      %16 = sbr.rel target = $region3
    $region8: #{tpu_custom_call.1} parent=1 // loop_exit
      _
    %1402 = vsyncpa [#allocation4], 1
    %s1403 = scalar_lea.sflag [#allocation4], 1
    %1404 = vsyncpa %s1403, 1
    %1405 = vsyncpa [#allocation7], 1
    %1406 = vsyncpa [#allocation5], 1
    %s1407 = scalar_lea.sflag [#allocation5], 1
    %1408 = vsyncpa %s1407, 1

</llo_original>
